<compile_context>
chip_gen: v5e
topology: v5e:2x2
jax: 0.10.0
libtpu: 0.0.40
codegen_flags: <defaults>
</compile_context>

<pallas_src>
import jax
import jax.numpy as jnp
import numpy as np
from jax.experimental import pallas as pl
from jax.experimental.pallas import tpu as pltpu

# ----------------------------- model hyper-params -----------------------------
N_FEATURES = 8          # n_features
N_LSTM_STATE = 8        # n_lstm_features
N_ACTIONS = 5           # n_actions
L_STEPS = 10            # n_lstm_step (sequence length)
HIDDEN = 20             # hidden_units_l1
N_LSTM = 20             # N_lstm == last TCN channel
TCN_CHANNELS = [50, 100, 20]
KSIZE = 3
DILATIONS = [1, 2, 4]
BATCH = 2
BL = BATCH * L_STEPS    # flattened activation rows
LANES = 128             # megaslab lane width

# unique non-zero causal shifts used by the dilated convs: (1, 2, 4, 8)
SHIFTS = tuple(sorted({(KSIZE - 1 - k) * d for d in DILATIONS for k in range(KSIZE - 1)}))


# ------------------------------ megaslab layout ------------------------------
def _round8(n):
    return ((n + 7) // 8) * 8


def _make_layout(sections):
    """Row layout with 8-row-aligned section starts: name -> (offset, rows)."""
    layout, off = {}, 0
    for name, rows in sections:
        layout[name] = (off, rows)
        off += _round8(rows)
    return layout, off


_BLOCK_IO = []
_cin = N_LSTM_STATE
for _cout in TCN_CHANNELS:
    _BLOCK_IO.append((_cin, _cout))
    _cin = _cout


def _sections():
    secs = [(f"shift{sh}", BL) for sh in SHIFTS]          # causal shift+mask matrices
    secs.append(("sel", BATCH))                           # last-timestep selection
    for i, (ci, co) in enumerate(_BLOCK_IO):
        secs += [(f"b{i}w1k{k}", ci) for k in range(KSIZE)]
        secs.append((f"b{i}b1", 1))
        secs += [(f"b{i}w2k{k}", co) for k in range(KSIZE)]
        secs.append((f"b{i}b2", 1))
        secs += [(f"b{i}wd", ci), (f"b{i}bd", 1)]
    secs += [("w1l", N_LSTM), ("w1s", N_FEATURES), ("bf1", 1),
             ("w2f", HIDDEN), ("bf2", 1), ("wcomb", HIDDEN), ("bcomb", 1)]
    return secs


LAYOUT, TOTAL_ROWS = _make_layout(_sections())


# ------------------------------- cost estimate --------------------------------
def _flops_estimate():
    f, cin = 0, N_LSTM_STATE
    for cout in TCN_CHANNELS:
        f += 2 * 2 * BL * BL * cin            # conv1 shift matmuls (2 shifted taps)
        f += 2 * BL * KSIZE * cin * cout      # conv1 tap matmuls
        f += 2 * 2 * BL * BL * cout           # conv2 shift matmuls
        f += 2 * BL * KSIZE * cout * cout     # conv2 tap matmuls
        f += 2 * BL * cin * cout              # 1x1 residual
        cin = cout
    f += 2 * BATCH * BL * N_LSTM                          # last-step selection matmul
    f += 2 * BATCH * (N_LSTM + N_FEATURES) * HIDDEN       # fc1 (split)
    f += 2 * BATCH * HIDDEN * HIDDEN                      # fc2
    f += 2 * BATCH * HIDDEN * LANES                       # folded dueling head
    return f


_FLOPS = _flops_estimate()
_BYTES = 4 * (TOTAL_ROWS * LANES + BL * N_LSTM_STATE + BATCH * N_FEATURES + BATCH * LANES)


# ------------------------------- Pallas kernel --------------------------------
def ddqn_kernel(x_ref, s_ref, slab_ref, out_ref):
    def sec(name, cols):
        off, rows = LAYOUT[name]
        return slab_ref[off:off + rows, :cols]

    # hoist shift-matrix loads (one static-slice load each, reused across blocks)
    shift_mats = {sh: sec(f"shift{sh}", BL) for sh in SHIFTS}

    def causal_conv(x, wprefix, bname, d, cout):
        # tap K-1 has zero shift; taps 0..K-2 use host-precomputed shift+mask matrices
        acc = jnp.dot(x, sec(f"{wprefix}k{KSIZE - 1}", cout),
                      preferred_element_type=jnp.float32)
        for k in range(KSIZE - 1):
            sh = (KSIZE - 1 - k) * d
            xs = jnp.dot(shift_mats[sh], x, preferred_element_type=jnp.float32)
            acc = acc + jnp.dot(xs, sec(f"{wprefix}k{k}", cout),
                                preferred_element_type=jnp.float32)
        return acc + sec(bname, cout)

    h = x_ref[...]                                         # (B*L, n_lstm_state)
    for i, (cout, d) in enumerate(zip(TCN_CHANNELS, DILATIONS)):
        h1 = jnp.maximum(causal_conv(h, f"b{i}w1", f"b{i}b1", d, cout), 0.0)
        # TODO(synk): dropout(p=0.1) treated as identity (eval-mode forward semantics)
        h2 = jnp.maximum(causal_conv(h1, f"b{i}w2", f"b{i}b2", d, cout), 0.0)
        res = jnp.dot(h, sec(f"b{i}wd", cout), preferred_element_type=jnp.float32) \
            + sec(f"b{i}bd", cout)
        h = jnp.maximum(h2 + res, 0.0)

    # lstm_out[:, -1, :] via one-hot selection matmul (rides the idle MXU)
    last = jnp.dot(sec("sel", BL), h, preferred_element_type=jnp.float32)  # (B, N_LSTM)

    # fc1 split into two matmuls (cat(lstm_out, s) without a lane concat)
    l1 = jnp.maximum(
        jnp.dot(last, sec("w1l", HIDDEN), preferred_element_type=jnp.float32)
        + jnp.dot(s_ref[...], sec("w1s", HIDDEN), preferred_element_type=jnp.float32)
        + sec("bf1", HIDDEN), 0.0)
    l2 = jnp.maximum(
        jnp.dot(l1, sec("w2f", HIDDEN), preferred_element_type=jnp.float32)
        + sec("bf2", HIDDEN), 0.0)

    # dueling combine folded host-side into (HIDDEN, 128) / (1, 128); lane-dense store
    out_ref[...] = jnp.dot(l2, sec("wcomb", LANES),
                           preferred_element_type=jnp.float32) + sec("bcomb", LANES)


# ------------------------------- wrapper (glue) --------------------------------
@jax.jit
def ddqn_forward(s, lstm_s, slab):
    B = s.shape[0]
    x_flat = lstm_s.reshape(B * L_STEPS, N_LSTM_STATE)
    out = pl.pallas_call(
        ddqn_kernel,
        out_shape=jax.ShapeDtypeStruct((B, LANES), jnp.float32),
        in_specs=[pl.BlockSpec(memory_space=pltpu.MemorySpace.VMEM)] * 3,
        out_specs=pl.BlockSpec(memory_space=pltpu.MemorySpace.VMEM),
        cost_estimate=pl.CostEstimate(flops=_FLOPS, transcendentals=0,
                                      bytes_accessed=_BYTES),
    )(x_flat, s, slab)
    return out[:, :N_ACTIONS]


# --------------------------- deterministic parameters ---------------------------
def init_params(key):
    keys = iter(jax.random.split(key, 64))

    def w(shape, scale=0.1):
        return (scale * jax.random.normal(next(keys), shape)).astype(jnp.float32)

    params = {}
    cin = N_LSTM_STATE
    for i, cout in enumerate(TCN_CHANNELS):
        # conv weights stored as (K, Cin, Cout) == PyTorch (Cout, Cin, K) transposed per tap
        params[f"b{i}w1"] = w((KSIZE, cin, cout))
        params[f"b{i}b1"] = w((1, cout))
        params[f"b{i}w2"] = w((KSIZE, cout, cout))
        params[f"b{i}b2"] = w((1, cout))
        params[f"b{i}wd"] = w((cin, cout))       # 1x1 residual conv, (Cin, Cout)
        params[f"b{i}bd"] = w((1, cout))
        cin = cout

    # fc1 split: [0:N_LSTM] acts on lstm_out, [N_LSTM:] on s (matches torch.cat order)
    params["w1l"] = w((N_LSTM, HIDDEN))
    params["w1s"] = w((N_FEATURES, HIDDEN))
    params["bf1"] = w((1, HIDDEN))
    params["w2f"] = w((HIDDEN, HIDDEN))
    params["bf2"] = w((1, HIDDEN))
    params["wv"] = w((HIDDEN, 1))
    params["bv"] = w((1, 1))
    params["wa"] = w((HIDDEN, N_ACTIONS))
    params["ba"] = w((1, N_ACTIONS))
    return params


def pack_params(p):
    """Pack shift/selection matrices and all weights into ONE (TOTAL_ROWS, 128) slab."""
    slab = np.zeros((TOTAL_ROWS, LANES), np.float32)

    def put(name, a):
        a = np.asarray(a, np.float32)
        off, rows = LAYOUT[name]
        assert a.shape[0] == rows, (name, a.shape, rows)
        slab[off:off + rows, :a.shape[1]] = a

    # causal shift+mask matrices: y = S @ x gives y[r] = x[r-sh] within each batch window
    for sh in SHIFTS:
        S = np.zeros((BL, BL), np.float32)
        for r in range(BL):
            if r % L_STEPS >= sh:
                S[r, r - sh] = 1.0
        put(f"shift{sh}", S)

    # one-hot selection of the last timestep of each batch element
    sel = np.zeros((BATCH, BL), np.float32)
    for b in range(BATCH):
        sel[b, b * L_STEPS + L_STEPS - 1] = 1.0
    put("sel", sel)

    for i in range(len(TCN_CHANNELS)):
        for k in range(KSIZE):
            put(f"b{i}w1k{k}", p[f"b{i}w1"][k])
            put(f"b{i}w2k{k}", p[f"b{i}w2"][k])
        put(f"b{i}b1", p[f"b{i}b1"])
        put(f"b{i}b2", p[f"b{i}b2"])
        put(f"b{i}wd", p[f"b{i}wd"])
        put(f"b{i}bd", p[f"b{i}bd"])

    put("w1l", p["w1l"]); put("w1s", p["w1s"]); put("bf1", p["bf1"])
    put("w2f", p["w2f"]); put("bf2", p["bf2"])

    # fold dueling combine: out = value + (adv - mean(adv)) = l2 @ Wc + bc
    ones = np.ones((1, N_ACTIONS), np.float32)
    center = np.eye(N_ACTIONS, dtype=np.float32) - np.full((N_ACTIONS, N_ACTIONS),
                                                           1.0 / N_ACTIONS, np.float32)
    wc = np.asarray(p["wv"], np.float32) @ ones + np.asarray(p["wa"], np.float32) @ center
    bc = np.asarray(p["bv"], np.float32) @ ones + np.asarray(p["ba"], np.float32) @ center
    put("wcomb", wc)
    put("bcomb", bc)
    return jnp.asarray(slab)


# ------------------------------ pure-JAX reference ------------------------------
def ddqn_reference(s, lstm_s, p):
    def causal_conv(x, wk, b, d):
        # x: (B, L, Cin), wk: (K, Cin, Cout)
        B, L, _ = x.shape
        out = 0.0
        for k in range(KSIZE):
            shift = (KSIZE - 1 - k) * d
            xs = jnp.pad(x, ((0, 0), (shift, 0), (0, 0)))[:, :L, :]
            out = out + jnp.einsum("blc,co->blo", xs, wk[k])
        return out + b

    def block(x, i, d):
        h = jax.nn.relu(causal_conv(x, p[f"b{i}w1"], p[f"b{i}b1"], d))
        h = jax.nn.relu(causal_conv(h, p[f"b{i}w2"], p[f"b{i}b2"], d))
        res = jnp.einsum("blc,co->blo", x, p[f"b{i}wd"]) + p[f"b{i}bd"]
        return jax.nn.relu(h + res)

    h = lstm_s
    for i, d in enumerate(DILATIONS):
        h = block(h, i, d)
    last = h[:, -1, :]
    l1 = jax.nn.relu(last @ p["w1l"] + s @ p["w1s"] + p["bf1"])
    l2 = jax.nn.relu(l1 @ p["w2f"] + p["bf2"])
    value = l2 @ p["wv"] + p["bv"]
    adv = l2 @ p["wa"] + p["ba"]
    return value + (adv - jnp.mean(adv, axis=1, keepdims=True))


# ------------------------------------ main --------------------------------------
if __name__ == "__main__":
    key = jax.random.PRNGKey(0)
    k_s, k_l, k_p = jax.random.split(key, 3)

    s = jax.random.normal(k_s, (BATCH, N_FEATURES), dtype=jnp.float32)
    lstm_s = jax.random.normal(k_l, (BATCH, L_STEPS, N_LSTM_STATE), dtype=jnp.float32)
    params = init_params(k_p)
    slab = pack_params(params)

    out = ddqn_forward(s, lstm_s, slab)
    out = jax.block_until_ready(out)

    ref = ddqn_reference(s, lstm_s, params)
    assert out.shape == (BATCH, N_ACTIONS)
    assert jnp.allclose(out, ref, atol=1e-4, rtol=1e-4), (out, ref)

    print("KERNEL_OK")
</pallas_src>

<mosaic_0001>
module attributes {stable_mosaic.version = 11 : i64} {
  func.func @ddqn_kernel(%arg0: memref<20x8xf32, #tpu.memory_space<vmem>>, %arg1: memref<2x8xf32, #tpu.memory_space<vmem>>, %arg2: memref<1504x128xf32, #tpu.memory_space<vmem>>, %arg3: memref<2x128xf32, #tpu.memory_space<vmem>>) attributes {dimension_semantics = [], scalar_prefetch = 0 : i64, scratch_operands = 0 : i64, tpu.core_type = #tpu.core_type<tc>} {
    %c0 = arith.constant 0 : index
    %c0_0 = arith.constant 0 : index
    %0 = vector.load %arg2[%c0, %c0_0] : memref<1504x128xf32, #tpu.memory_space<vmem>>, vector<20x20xf32>
    %c24 = arith.constant 24 : index
    %c0_1 = arith.constant 0 : index
    %1 = vector.load %arg2[%c24, %c0_1] : memref<1504x128xf32, #tpu.memory_space<vmem>>, vector<20x20xf32>
    %c48 = arith.constant 48 : index
    %c0_2 = arith.constant 0 : index
    %2 = vector.load %arg2[%c48, %c0_2] : memref<1504x128xf32, #tpu.memory_space<vmem>>, vector<20x20xf32>
    %c72 = arith.constant 72 : index
    %c0_3 = arith.constant 0 : index
    %3 = vector.load %arg2[%c72, %c0_3] : memref<1504x128xf32, #tpu.memory_space<vmem>>, vector<20x20xf32>
    %c0_4 = arith.constant 0 : index
    %c0_5 = arith.constant 0 : index
    %4 = vector.load %arg0[%c0_4, %c0_5] : memref<20x8xf32, #tpu.memory_space<vmem>>, vector<20x8xf32>
    %c120 = arith.constant 120 : index
    %c0_6 = arith.constant 0 : index
    %5 = vector.load %arg2[%c120, %c0_6] : memref<1504x128xf32, #tpu.memory_space<vmem>>, vector<8x50xf32>
    %cst = arith.constant dense<0.000000e+00> : vector<20x50xf32>
    %6 = tpu.matmul %4, %5, %cst {dimension_numbers = #tpu.dot_dimension_numbers<[1], [0], [0], [1], [0, 0, 1, 1], [], []>} : vector<20x8xf32>, vector<8x50xf32>, vector<20x50xf32> -> vector<20x50xf32>
    %cst_7 = arith.constant dense<0.000000e+00> : vector<20x8xf32>
    %7 = tpu.matmul %1, %4, %cst_7 {dimension_numbers = #tpu.dot_dimension_numbers<[1], [0], [0], [1], [0, 0, 1, 1], [], []>} : vector<20x20xf32>, vector<20x8xf32>, vector<20x8xf32> -> vector<20x8xf32>
    %c104 = arith.constant 104 : index
    %c0_8 = arith.constant 0 : index
    %8 = vector.load %arg2[%c104, %c0_8] : memref<1504x128xf32, #tpu.memory_space<vmem>>, vector<8x50xf32>
    %cst_9 = arith.constant dense<0.000000e+00> : vector<20x50xf32>
    %9 = tpu.matmul %7, %8, %cst_9 {dimension_numbers = #tpu.dot_dimension_numbers<[1], [0], [0], [1], [0, 0, 1, 1], [], []>} : vector<20x8xf32>, vector<8x50xf32>, vector<20x50xf32> -> vector<20x50xf32>
    %10 = arith.addf %6, %9 : vector<20x50xf32>
    %cst_10 = arith.constant dense<0.000000e+00> : vector<20x8xf32>
    %11 = tpu.matmul %0, %4, %cst_10 {dimension_numbers = #tpu.dot_dimension_numbers<[1], [0], [0], [1], [0, 0, 1, 1], [], []>} : vector<20x20xf32>, vector<20x8xf32>, vector<20x8xf32> -> vector<20x8xf32>
    %c112 = arith.constant 112 : index
    %c0_11 = arith.constant 0 : index
    %12 = vector.load %arg2[%c112, %c0_11] : memref<1504x128xf32, #tpu.memory_space<vmem>>, vector<8x50xf32>
    %cst_12 = arith.constant dense<0.000000e+00> : vector<20x50xf32>
    %13 = tpu.matmul %11, %12, %cst_12 {dimension_numbers = #tpu.dot_dimension_numbers<[1], [0], [0], [1], [0, 0, 1, 1], [], []>} : vector<20x8xf32>, vector<8x50xf32>, vector<20x50xf32> -> vector<20x50xf32>
    %14 = arith.addf %10, %13 : vector<20x50xf32>
    %c128 = arith.constant 128 : index
    %c0_13 = arith.constant 0 : index
    %15 = vector.load %arg2[%c128, %c0_13] : memref<1504x128xf32, #tpu.memory_space<vmem>>, vector<1x50xf32>
    %16 = vector.broadcast %15 : vector<1x50xf32> to vector<20x50xf32>
    %17 = arith.addf %14, %16 : vector<20x50xf32>
    %cst_14 = arith.constant 0.000000e+00 : f32
    %18 = vector.broadcast %cst_14 : f32 to vector<20x50xf32>
    %19 = arith.maximumf %17, %18 : vector<20x50xf32>
    %c248 = arith.constant 248 : index
    %c0_15 = arith.constant 0 : index
    %20 = vector.load %arg2[%c248, %c0_15] : memref<1504x128xf32, #tpu.memory_space<vmem>>, vector<50x50xf32>
    %cst_16 = arith.constant dense<0.000000e+00> : vector<20x50xf32>
    %21 = tpu.matmul %19, %20, %cst_16 {dimension_numbers = #tpu.dot_dimension_numbers<[1], [0], [0], [1], [0, 0, 1, 1], [], []>} : vector<20x50xf32>, vector<50x50xf32>, vector<20x50xf32> -> vector<20x50xf32>
    %cst_17 = arith.constant dense<0.000000e+00> : vector<20x50xf32>
    %22 = tpu.matmul %1, %19, %cst_17 {dimension_numbers = #tpu.dot_dimension_numbers<[1], [0], [0], [1], [0, 0, 1, 1], [], []>} : vector<20x20xf32>, vector<20x50xf32>, vector<20x50xf32> -> vector<20x50xf32>
    %c136 = arith.constant 136 : index
    %c0_18 = arith.constant 0 : index
    %23 = vector.load %arg2[%c136, %c0_18] : memref<1504x128xf32, #tpu.memory_space<vmem>>, vector<50x50xf32>
    %cst_19 = arith.constant dense<0.000000e+00> : vector<20x50xf32>
    %24 = tpu.matmul %22, %23, %cst_19 {dimension_numbers = #tpu.dot_dimension_numbers<[1], [0], [0], [1], [0, 0, 1, 1], [], []>} : vector<20x50xf32>, vector<50x50xf32>, vector<20x50xf32> -> vector<20x50xf32>
    %25 = arith.addf %21, %24 : vector<20x50xf32>
    %cst_20 = arith.constant dense<0.000000e+00> : vector<20x50xf32>
    %26 = tpu.matmul %0, %19, %cst_20 {dimension_numbers = #tpu.dot_dimension_numbers<[1], [0], [0], [1], [0, 0, 1, 1], [], []>} : vector<20x20xf32>, vector<20x50xf32>, vector<20x50xf32> -> vector<20x50xf32>
    %c192 = arith.constant 192 : index
    %c0_21 = arith.constant 0 : index
    %27 = vector.load %arg2[%c192, %c0_21] : memref<1504x128xf32, #tpu.memory_space<vmem>>, vector<50x50xf32>
    %cst_22 = arith.constant dense<0.000000e+00> : vector<20x50xf32>
    %28 = tpu.matmul %26, %27, %cst_22 {dimension_numbers = #tpu.dot_dimension_numbers<[1], [0], [0], [1], [0, 0, 1, 1], [], []>} : vector<20x50xf32>, vector<50x50xf32>, vector<20x50xf32> -> vector<20x50xf32>
    %29 = arith.addf %25, %28 : vector<20x50xf32>
    %c304 = arith.constant 304 : index
    %c0_23 = arith.constant 0 : index
    %30 = vector.load %arg2[%c304, %c0_23] : memref<1504x128xf32, #tpu.memory_space<vmem>>, vector<1x50xf32>
    %31 = vector.broadcast %30 : vector<1x50xf32> to vector<20x50xf32>
    %32 = arith.addf %29, %31 : vector<20x50xf32>
    %cst_24 = arith.constant 0.000000e+00 : f32
    %33 = vector.broadcast %cst_24 : f32 to vector<20x50xf32>
    %34 = arith.maximumf %32, %33 : vector<20x50xf32>
    %c312 = arith.constant 312 : index
    %c0_25 = arith.constant 0 : index
    %35 = vector.load %arg2[%c312, %c0_25] : memref<1504x128xf32, #tpu.memory_space<vmem>>, vector<8x50xf32>
    %cst_26 = arith.constant dense<0.000000e+00> : vector<20x50xf32>
    %36 = tpu.matmul %4, %35, %cst_26 {dimension_numbers = #tpu.dot_dimension_numbers<[1], [0], [0], [1], [0, 0, 1, 1], [], []>} : vector<20x8xf32>, vector<8x50xf32>, vector<20x50xf32> -> vector<20x50xf32>
    %c320 = arith.constant 320 : index
    %c0_27 = arith.constant 0 : index
    %37 = vector.load %arg2[%c320, %c0_27] : memref<1504x128xf32, #tpu.memory_space<vmem>>, vector<1x50xf32>
    %38 = vector.broadcast %37 : vector<1x50xf32> to vector<20x50xf32>
    %39 = arith.addf %36, %38 : vector<20x50xf32>
    %40 = arith.addf %34, %39 : vector<20x50xf32>
    %cst_28 = arith.constant 0.000000e+00 : f32
    %41 = vector.broadcast %cst_28 : f32 to vector<20x50xf32>
    %42 = arith.maximumf %40, %41 : vector<20x50xf32>
    %c440 = arith.constant 440 : index
    %c0_29 = arith.constant 0 : index
    %43 = vector.load %arg2[%c440, %c0_29] : memref<1504x128xf32, #tpu.memory_space<vmem>>, vector<50x100xf32>
    %cst_30 = arith.constant dense<0.000000e+00> : vector<20x100xf32>
    %44 = tpu.matmul %42, %43, %cst_30 {dimension_numbers = #tpu.dot_dimension_numbers<[1], [0], [0], [1], [0, 0, 1, 1], [], []>} : vector<20x50xf32>, vector<50x100xf32>, vector<20x100xf32> -> vector<20x100xf32>
    %cst_31 = arith.constant dense<0.000000e+00> : vector<20x50xf32>
    %45 = tpu.matmul %2, %42, %cst_31 {dimension_numbers = #tpu.dot_dimension_numbers<[1], [0], [0], [1], [0, 0, 1, 1], [], []>} : vector<20x20xf32>, vector<20x50xf32>, vector<20x50xf32> -> vector<20x50xf32>
    %c328 = arith.constant 328 : index
    %c0_32 = arith.constant 0 : index
    %46 = vector.load %arg2[%c328, %c0_32] : memref<1504x128xf32, #tpu.memory_space<vmem>>, vector<50x100xf32>
    %cst_33 = arith.constant dense<0.000000e+00> : vector<20x100xf32>
    %47 = tpu.matmul %45, %46, %cst_33 {dimension_numbers = #tpu.dot_dimension_numbers<[1], [0], [0], [1], [0, 0, 1, 1], [], []>} : vector<20x50xf32>, vector<50x100xf32>, vector<20x100xf32> -> vector<20x100xf32>
    %48 = arith.addf %44, %47 : vector<20x100xf32>
    %cst_34 = arith.constant dense<0.000000e+00> : vector<20x50xf32>
    %49 = tpu.matmul %1, %42, %cst_34 {dimension_numbers = #tpu.dot_dimension_numbers<[1], [0], [0], [1], [0, 0, 1, 1], [], []>} : vector<20x20xf32>, vector<20x50xf32>, vector<20x50xf32> -> vector<20x50xf32>
    %c384 = arith.constant 384 : index
    %c0_35 = arith.constant 0 : index
    %50 = vector.load %arg2[%c384, %c0_35] : memref<1504x128xf32, #tpu.memory_space<vmem>>, vector<50x100xf32>
    %cst_36 = arith.constant dense<0.000000e+00> : vector<20x100xf32>
    %51 = tpu.matmul %49, %50, %cst_36 {dimension_numbers = #tpu.dot_dimension_numbers<[1], [0], [0], [1], [0, 0, 1, 1], [], []>} : vector<20x50xf32>, vector<50x100xf32>, vector<20x100xf32> -> vector<20x100xf32>
    %52 = arith.addf %48, %51 : vector<20x100xf32>
    %c496 = arith.constant 496 : index
    %c0_37 = arith.constant 0 : index
    %53 = vector.load %arg2[%c496, %c0_37] : memref<1504x128xf32, #tpu.memory_space<vmem>>, vector<1x100xf32>
    %54 = vector.broadcast %53 : vector<1x100xf32> to vector<20x100xf32>
    %55 = arith.addf %52, %54 : vector<20x100xf32>
    %cst_38 = arith.constant 0.000000e+00 : f32
    %56 = vector.broadcast %cst_38 : f32 to vector<20x100xf32>
    %57 = arith.maximumf %55, %56 : vector<20x100xf32>
    %c712 = arith.constant 712 : index
    %c0_39 = arith.constant 0 : index
    %58 = vector.load %arg2[%c712, %c0_39] : memref<1504x128xf32, #tpu.memory_space<vmem>>, vector<100x100xf32>
    %cst_40 = arith.constant dense<0.000000e+00> : vector<20x100xf32>
    %59 = tpu.matmul %57, %58, %cst_40 {dimension_numbers = #tpu.dot_dimension_numbers<[1], [0], [0], [1], [0, 0, 1, 1], [], []>} : vector<20x100xf32>, vector<100x100xf32>, vector<20x100xf32> -> vector<20x100xf32>
    %cst_41 = arith.constant dense<0.000000e+00> : vector<20x100xf32>
    %60 = tpu.matmul %2, %57, %cst_41 {dimension_numbers = #tpu.dot_dimension_numbers<[1], [0], [0], [1], [0, 0, 1, 1], [], []>} : vector<20x20xf32>, vector<20x100xf32>, vector<20x100xf32> -> vector<20x100xf32>
    %c504 = arith.constant 504 : index
    %c0_42 = arith.constant 0 : index
    %61 = vector.load %arg2[%c504, %c0_42] : memref<1504x128xf32, #tpu.memory_space<vmem>>, vector<100x100xf32>
    %cst_43 = arith.constant dense<0.000000e+00> : vector<20x100xf32>
    %62 = tpu.matmul %60, %61, %cst_43 {dimension_numbers = #tpu.dot_dimension_numbers<[1], [0], [0], [1], [0, 0, 1, 1], [], []>} : vector<20x100xf32>, vector<100x100xf32>, vector<20x100xf32> -> vector<20x100xf32>
    %63 = arith.addf %59, %62 : vector<20x100xf32>
    %cst_44 = arith.constant dense<0.000000e+00> : vector<20x100xf32>
    %64 = tpu.matmul %1, %57, %cst_44 {dimension_numbers = #tpu.dot_dimension_numbers<[1], [0], [0], [1], [0, 0, 1, 1], [], []>} : vector<20x20xf32>, vector<20x100xf32>, vector<20x100xf32> -> vector<20x100xf32>
    %c608 = arith.constant 608 : index
    %c0_45 = arith.constant 0 : index
    %65 = vector.load %arg2[%c608, %c0_45] : memref<1504x128xf32, #tpu.memory_space<vmem>>, vector<100x100xf32>
    %cst_46 = arith.constant dense<0.000000e+00> : vector<20x100xf32>
    %66 = tpu.matmul %64, %65, %cst_46 {dimension_numbers = #tpu.dot_dimension_numbers<[1], [0], [0], [1], [0, 0, 1, 1], [], []>} : vector<20x100xf32>, vector<100x100xf32>, vector<20x100xf32> -> vector<20x100xf32>
    %67 = arith.addf %63, %66 : vector<20x100xf32>
    %c816 = arith.constant 816 : index
    %c0_47 = arith.constant 0 : index
    %68 = vector.load %arg2[%c816, %c0_47] : memref<1504x128xf32, #tpu.memory_space<vmem>>, vector<1x100xf32>
    %69 = vector.broadcast %68 : vector<1x100xf32> to vector<20x100xf32>
    %70 = arith.addf %67, %69 : vector<20x100xf32>
    %cst_48 = arith.constant 0.000000e+00 : f32
    %71 = vector.broadcast %cst_48 : f32 to vector<20x100xf32>
    %72 = arith.maximumf %70, %71 : vector<20x100xf32>
    %c824 = arith.constant 824 : index
    %c0_49 = arith.constant 0 : index
    %73 = vector.load %arg2[%c824, %c0_49] : memref<1504x128xf32, #tpu.memory_space<vmem>>, vector<50x100xf32>
    %cst_50 = arith.constant dense<0.000000e+00> : vector<20x100xf32>
    %74 = tpu.matmul %42, %73, %cst_50 {dimension_numbers = #tpu.dot_dimension_numbers<[1], [0], [0], [1], [0, 0, 1, 1], [], []>} : vector<20x50xf32>, vector<50x100xf32>, vector<20x100xf32> -> vector<20x100xf32>
    %c880 = arith.constant 880 : index
    %c0_51 = arith.constant 0 : index
    %75 = vector.load %arg2[%c880, %c0_51] : memref<1504x128xf32, #tpu.memory_space<vmem>>, vector<1x100xf32>
    %76 = vector.broadcast %75 : vector<1x100xf32> to vector<20x100xf32>
    %77 = arith.addf %74, %76 : vector<20x100xf32>
    %78 = arith.addf %72, %77 : vector<20x100xf32>
    %cst_52 = arith.constant 0.000000e+00 : f32
    %79 = vector.broadcast %cst_52 : f32 to vector<20x100xf32>
    %80 = arith.maximumf %78, %79 : vector<20x100xf32>
    %c1096 = arith.constant 1096 : index
    %c0_53 = arith.constant 0 : index
    %81 = vector.load %arg2[%c1096, %c0_53] : memref<1504x128xf32, #tpu.memory_space<vmem>>, vector<100x20xf32>
    %cst_54 = arith.constant dense<0.000000e+00> : vector<20x20xf32>
    %82 = tpu.matmul %80, %81, %cst_54 {dimension_numbers = #tpu.dot_dimension_numbers<[1], [0], [0], [1], [0, 0, 1, 1], [], []>} : vector<20x100xf32>, vector<100x20xf32>, vector<20x20xf32> -> vector<20x20xf32>
    %cst_55 = arith.constant dense<0.000000e+00> : vector<20x100xf32>
    %83 = tpu.matmul %3, %80, %cst_55 {dimension_numbers = #tpu.dot_dimension_numbers<[1], [0], [0], [1], [0, 0, 1, 1], [], []>} : vector<20x20xf32>, vector<20x100xf32>, vector<20x100xf32> -> vector<20x100xf32>
    %c888 = arith.constant 888 : index
    %c0_56 = arith.constant 0 : index
    %84 = vector.load %arg2[%c888, %c0_56] : memref<1504x128xf32, #tpu.memory_space<vmem>>, vector<100x20xf32>
    %cst_57 = arith.constant dense<0.000000e+00> : vector<20x20xf32>
    %85 = tpu.matmul %83, %84, %cst_57 {dimension_numbers = #tpu.dot_dimension_numbers<[1], [0], [0], [1], [0, 0, 1, 1], [], []>} : vector<20x100xf32>, vector<100x20xf32>, vector<20x20xf32> -> vector<20x20xf32>
    %86 = arith.addf %82, %85 : vector<20x20xf32>
    %cst_58 = arith.constant dense<0.000000e+00> : vector<20x100xf32>
    %87 = tpu.matmul %2, %80, %cst_58 {dimension_numbers = #tpu.dot_dimension_numbers<[1], [0], [0], [1], [0, 0, 1, 1], [], []>} : vector<20x20xf32>, vector<20x100xf32>, vector<20x100xf32> -> vector<20x100xf32>
    %c992 = arith.constant 992 : index
    %c0_59 = arith.constant 0 : index
    %88 = vector.load %arg2[%c992, %c0_59] : memref<1504x128xf32, #tpu.memory_space<vmem>>, vector<100x20xf32>
    %cst_60 = arith.constant dense<0.000000e+00> : vector<20x20xf32>
    %89 = tpu.matmul %87, %88, %cst_60 {dimension_numbers = #tpu.dot_dimension_numbers<[1], [0], [0], [1], [0, 0, 1, 1], [], []>} : vector<20x100xf32>, vector<100x20xf32>, vector<20x20xf32> -> vector<20x20xf32>
    %90 = arith.addf %86, %89 : vector<20x20xf32>
    %c1200 = arith.constant 1200 : index
    %c0_61 = arith.constant 0 : index
    %91 = vector.load %arg2[%c1200, %c0_61] : memref<1504x128xf32, #tpu.memory_space<vmem>>, vector<1x20xf32>
    %92 = vector.broadcast %91 : vector<1x20xf32> to vector<20x20xf32>
    %93 = arith.addf %90, %92 : vector<20x20xf32>
    %cst_62 = arith.constant 0.000000e+00 : f32
    %94 = vector.broadcast %cst_62 : f32 to vector<20x20xf32>
    %95 = arith.maximumf %93, %94 : vector<20x20xf32>
    %c1256 = arith.constant 1256 : index
    %c0_63 = arith.constant 0 : index
    %96 = vector.load %arg2[%c1256, %c0_63] : memref<1504x128xf32, #tpu.memory_space<vmem>>, vector<20x20xf32>
    %cst_64 = arith.constant dense<0.000000e+00> : vector<20x20xf32>
    %97 = tpu.matmul %95, %96, %cst_64 {dimension_numbers = #tpu.dot_dimension_numbers<[1], [0], [0], [1], [0, 0, 1, 1], [], []>} : vector<20x20xf32>, vector<20x20xf32>, vector<20x20xf32> -> vector<20x20xf32>
    %cst_65 = arith.constant dense<0.000000e+00> : vector<20x20xf32>
    %98 = tpu.matmul %3, %95, %cst_65 {dimension_numbers = #tpu.dot_dimension_numbers<[1], [0], [0], [1], [0, 0, 1, 1], [], []>} : vector<20x20xf32>, vector<20x20xf32>, vector<20x20xf32> -> vector<20x20xf32>
    %c1208 = arith.constant 1208 : index
    %c0_66 = arith.constant 0 : index
    %99 = vector.load %arg2[%c1208, %c0_66] : memref<1504x128xf32, #tpu.memory_space<vmem>>, vector<20x20xf32>
    %cst_67 = arith.constant dense<0.000000e+00> : vector<20x20xf32>
    %100 = tpu.matmul %98, %99, %cst_67 {dimension_numbers = #tpu.dot_dimension_numbers<[1], [0], [0], [1], [0, 0, 1, 1], [], []>} : vector<20x20xf32>, vector<20x20xf32>, vector<20x20xf32> -> vector<20x20xf32>
    %101 = arith.addf %97, %100 : vector<20x20xf32>
    %cst_68 = arith.constant dense<0.000000e+00> : vector<20x20xf32>
    %102 = tpu.matmul %2, %95, %cst_68 {dimension_numbers = #tpu.dot_dimension_numbers<[1], [0], [0], [1], [0, 0, 1, 1], [], []>} : vector<20x20xf32>, vector<20x20xf32>, vector<20x20xf32> -> vector<20x20xf32>
    %c1232 = arith.constant 1232 : index
    %c0_69 = arith.constant 0 : index
    %103 = vector.load %arg2[%c1232, %c0_69] : memref<1504x128xf32, #tpu.memory_space<vmem>>, vector<20x20xf32>
    %cst_70 = arith.constant dense<0.000000e+00> : vector<20x20xf32>
    %104 = tpu.matmul %102, %103, %cst_70 {dimension_numbers = #tpu.dot_dimension_numbers<[1], [0], [0], [1], [0, 0, 1, 1], [], []>} : vector<20x20xf32>, vector<20x20xf32>, vector<20x20xf32> -> vector<20x20xf32>
    %105 = arith.addf %101, %104 : vector<20x20xf32>
    %c1280 = arith.constant 1280 : index
    %c0_71 = arith.constant 0 : index
    %106 = vector.load %arg2[%c1280, %c0_71] : memref<1504x128xf32, #tpu.memory_space<vmem>>, vector<1x20xf32>
    %107 = vector.broadcast %106 : vector<1x20xf32> to vector<20x20xf32>
    %108 = arith.addf %105, %107 : vector<20x20xf32>
    %cst_72 = arith.constant 0.000000e+00 : f32
    %109 = vector.broadcast %cst_72 : f32 to vector<20x20xf32>
    %110 = arith.maximumf %108, %109 : vector<20x20xf32>
    %c1288 = arith.constant 1288 : index
    %c0_73 = arith.constant 0 : index
    %111 = vector.load %arg2[%c1288, %c0_73] : memref<1504x128xf32, #tpu.memory_space<vmem>>, vector<100x20xf32>
    %cst_74 = arith.constant dense<0.000000e+00> : vector<20x20xf32>
    %112 = tpu.matmul %80, %111, %cst_74 {dimension_numbers = #tpu.dot_dimension_numbers<[1], [0], [0], [1], [0, 0, 1, 1], [], []>} : vector<20x100xf32>, vector<100x20xf32>, vector<20x20xf32> -> vector<20x20xf32>
    %c1392 = arith.constant 1392 : index
    %c0_75 = arith.constant 0 : index
    %113 = vector.load %arg2[%c1392, %c0_75] : memref<1504x128xf32, #tpu.memory_space<vmem>>, vector<1x20xf32>
    %114 = vector.broadcast %113 : vector<1x20xf32> to vector<20x20xf32>
    %115 = arith.addf %112, %114 : vector<20x20xf32>
    %116 = arith.addf %110, %115 : vector<20x20xf32>
    %cst_76 = arith.constant 0.000000e+00 : f32
    %117 = vector.broadcast %cst_76 : f32 to vector<20x20xf32>
    %118 = arith.maximumf %116, %117 : vector<20x20xf32>
    %c96 = arith.constant 96 : index
    %c0_77 = arith.constant 0 : index
    %119 = vector.load %arg2[%c96, %c0_77] : memref<1504x128xf32, #tpu.memory_space<vmem>>, vector<2x20xf32>
    %cst_78 = arith.constant dense<0.000000e+00> : vector<2x20xf32>
    %120 = tpu.matmul %119, %118, %cst_78 {dimension_numbers = #tpu.dot_dimension_numbers<[1], [0], [0], [1], [0, 0, 1, 1], [], []>} : vector<2x20xf32>, vector<20x20xf32>, vector<2x20xf32> -> vector<2x20xf32>
    %c1400 = arith.constant 1400 : index
    %c0_79 = arith.constant 0 : index
    %121 = vector.load %arg2[%c1400, %c0_79] : memref<1504x128xf32, #tpu.memory_space<vmem>>, vector<20x20xf32>
    %cst_80 = arith.constant dense<0.000000e+00> : vector<2x20xf32>
    %122 = tpu.matmul %120, %121, %cst_80 {dimension_numbers = #tpu.dot_dimension_numbers<[1], [0], [0], [1], [0, 0, 1, 1], [], []>} : vector<2x20xf32>, vector<20x20xf32>, vector<2x20xf32> -> vector<2x20xf32>
    %c0_81 = arith.constant 0 : index
    %c0_82 = arith.constant 0 : index
    %123 = vector.load %arg1[%c0_81, %c0_82] : memref<2x8xf32, #tpu.memory_space<vmem>>, vector<2x8xf32>
    %c1424 = arith.constant 1424 : index
    %c0_83 = arith.constant 0 : index
    %124 = vector.load %arg2[%c1424, %c0_83] : memref<1504x128xf32, #tpu.memory_space<vmem>>, vector<8x20xf32>
    %cst_84 = arith.constant dense<0.000000e+00> : vector<2x20xf32>
    %125 = tpu.matmul %123, %124, %cst_84 {dimension_numbers = #tpu.dot_dimension_numbers<[1], [0], [0], [1], [0, 0, 1, 1], [], []>} : vector<2x8xf32>, vector<8x20xf32>, vector<2x20xf32> -> vector<2x20xf32>
    %126 = arith.addf %122, %125 : vector<2x20xf32>
    %c1432 = arith.constant 1432 : index
    %c0_85 = arith.constant 0 : index
    %127 = vector.load %arg2[%c1432, %c0_85] : memref<1504x128xf32, #tpu.memory_space<vmem>>, vector<1x20xf32>
    %128 = vector.broadcast %127 : vector<1x20xf32> to vector<2x20xf32>
    %129 = arith.addf %126, %128 : vector<2x20xf32>
    %cst_86 = arith.constant 0.000000e+00 : f32
    %130 = vector.broadcast %cst_86 : f32 to vector<2x20xf32>
    %131 = arith.maximumf %129, %130 : vector<2x20xf32>
    %c1440 = arith.constant 1440 : index
    %c0_87 = arith.constant 0 : index
    %132 = vector.load %arg2[%c1440, %c0_87] : memref<1504x128xf32, #tpu.memory_space<vmem>>, vector<20x20xf32>
    %cst_88 = arith.constant dense<0.000000e+00> : vector<2x20xf32>
    %133 = tpu.matmul %131, %132, %cst_88 {dimension_numbers = #tpu.dot_dimension_numbers<[1], [0], [0], [1], [0, 0, 1, 1], [], []>} : vector<2x20xf32>, vector<20x20xf32>, vector<2x20xf32> -> vector<2x20xf32>
    %c1464 = arith.constant 1464 : index
    %c0_89 = arith.constant 0 : index
    %134 = vector.load %arg2[%c1464, %c0_89] : memref<1504x128xf32, #tpu.memory_space<vmem>>, vector<1x20xf32>
    %135 = vector.broadcast %134 : vector<1x20xf32> to vector<2x20xf32>
    %136 = arith.addf %133, %135 : vector<2x20xf32>
    %cst_90 = arith.constant 0.000000e+00 : f32
    %137 = vector.broadcast %cst_90 : f32 to vector<2x20xf32>
    %138 = arith.maximumf %136, %137 : vector<2x20xf32>
    %c1472 = arith.constant 1472 : index
    %c0_91 = arith.constant 0 : index
    %139 = vector.load %arg2[%c1472, %c0_91] : memref<1504x128xf32, #tpu.memory_space<vmem>>, vector<20x128xf32>
    %cst_92 = arith.constant dense<0.000000e+00> : vector<2x128xf32>
    %140 = tpu.matmul %138, %139, %cst_92 {dimension_numbers = #tpu.dot_dimension_numbers<[1], [0], [0], [1], [0, 0, 1, 1], [], []>} : vector<2x20xf32>, vector<20x128xf32>, vector<2x128xf32> -> vector<2x128xf32>
    %c1496 = arith.constant 1496 : index
    %c0_93 = arith.constant 0 : index
    %141 = vector.load %arg2[%c1496, %c0_93] : memref<1504x128xf32, #tpu.memory_space<vmem>>, vector<1x128xf32>
    %142 = vector.broadcast %141 : vector<1x128xf32> to vector<2x128xf32>
    %143 = arith.addf %140, %142 : vector<2x128xf32>
    %c0_94 = arith.constant 0 : index
    %c0_95 = arith.constant 0 : index
    %144 = vector.load %arg3[%c0_94, %c0_95] : memref<2x128xf32, #tpu.memory_space<vmem>>, vector<2x128xf32>
    tpu.vector_store %arg3[%c0_94, %c0_95], %143 {strides = array<i32>} : memref<2x128xf32, #tpu.memory_space<vmem>>, vector<2x128xf32>,
    return
  }
}

</mosaic_0001>

<llo_original>
// kernel: ddqn_forward.1
$region0: #{ddqn_forward.1}
  #allocation0 [shape = 'u32[]', space=smem, size = 0x4, offset = 0x4, fixed_abs, tag = 'smem constant byte address 0x4 - core index']
  #allocation1 [shape = 'u32[72,128]{1,0:T(1,128)}', space=vmem, size = 0x9000, scoped, tag = 'internal scratch']
  %s0 = inlined_call_operand.vmem [shape: f32[20,8], index: 0, kind: input, shape index: {}]
  %s1 = inlined_call_operand.vmem [shape: f32[2,8], index: 1, kind: input, shape index: {}]
  %s2 = inlined_call_operand.hbm [shape: f32[1504,128], index: 2, kind: input, shape index: {}]
  %s3 = inlined_call_operand.hbm [shape: f32[2,128], index: 3, kind: output, shape index: {}]
  %s4 = sld [smem:[#allocation0]]
  $region26: #{ddqn_forward.1} parent=0
    _
  %s6 = ssub.s32 1, %s4
  %s7 = scalar_select 0, %s6, %s4
  $region1: #{ddqn_forward.1} parent=0
    #allocation2 [shape = 'u8[770048]{0}', space=vmem, size = 0xbc000, scoped, tag = 'input window, operand 2, single buffered']
    #allocation3 [shape = 's32[1]{0}', space=sflag, size = 0x4, scoped, tag = 'scoped memory for ddqn_forward.1']
    #allocation4 [shape = 's32[1]{0}', space=sflag, size = 0x4, scoped, tag = 'scoped memory for ddqn_forward.1']
    #allocation5 [shape = 'u8[1024]{0}', space=vmem, size = 0x400, scoped, tag = 'output window, operand 0, single buffered']
    %8 = vsyncpa [#allocation3], 0
    %9 = vsyncpa [#allocation4], 0
    // Predicated region
    $region2: #{ddqn_forward.1} parent=1 // pred_check
      _
    $region3: #{ddqn_forward.1} parent=1 // pred_check_branch
      %11 = sbr.rel (0) target = $region5
    $region4: #{ddqn_forward.1} parent=1 // pred_region
      _
    $region5: #{ddqn_forward.1} parent=1 // pred_fallthru
      _
    // Predicated region
    $region6: #{ddqn_forward.1} parent=1 // pred_check
      _
    $region7: #{ddqn_forward.1} parent=1 // pred_check_branch
      %13 = sbr.rel (0) target = $region9
    $region8: #{ddqn_forward.1} parent=1 // pred_region
      _
    $region9: #{ddqn_forward.1} parent=1 // pred_fallthru
      _
    // Predicated region
    $region10: #{ddqn_forward.1} parent=1 // pred_check
      _
    $region11: #{ddqn_forward.1} parent=1 // pred_check_branch
      %15 = sbr.rel (0) target = $region13
    $region12: #{ddqn_forward.1} parent=1 // pred_region
      %17 = vsyncadd [#allocation3], 0
      %s18 = sshll.u32 %s2, 4
      %s19 = int_to_ptr.hbm [resolvable:$true] %s18
      %s20 = sshll.u32 [#allocation2], 4
      %s21 = int_to_ptr.vmem [resolvable:$true] %s20
      %26 = dma.hbm_to_vmem [thread:$0]  %s19, 24064, %s21, [#allocation3], 128, 128, 8
    $region13: #{ddqn_forward.1} parent=1 // pred_fallthru
      _
    // Predicated region
    $region14: #{ddqn_forward.1} parent=1 // pred_check
      _
    $region15: #{ddqn_forward.1} parent=1 // pred_check_branch
      %28 = sbr.rel (0) target = $region17
    $region16: #{ddqn_forward.1} parent=1 // pred_region
      %30 = dma.done [#allocation3], 24064
    $region17: #{ddqn_forward.1} parent=1 // pred_fallthru
      _
    %v31 = vld [vmem:[#allocation2] sm:$0xff]
    %v32 = vld [vmem:[#allocation2 + $0x8] sm:$0xff]
    %v33 = vld [vmem:[#allocation2 + $0x10] sm:$0xf]
    %v34 = vld [vmem:[#allocation2 + $0x18] sm:$0xff]
    %v35 = vld [vmem:[#allocation2 + $0x20] sm:$0xff]
    %v36 = vld [vmem:[#allocation2 + $0x28] sm:$0xf]
    %v37 = vld [vmem:[#allocation2 + $0x30] sm:$0xff]
    %v38 = vld [vmem:[#allocation2 + $0x38] sm:$0xff]
    %v39 = vld [vmem:[#allocation2 + $0x40] sm:$0xf]
    %v40 = vld [vmem:[#allocation2 + $0x48] sm:$0xff]
    %v41 = vld [vmem:[#allocation2 + $0x50] sm:$0xff]
    %v42 = vld [vmem:[#allocation2 + $0x58] sm:$0xf]
    %v43 = vld [vmem:[%s0] sm:$0xff]
    %v44 = vld [vmem:[%s0 + $0x8] sm:$0xff]
    %v45 = vld [vmem:[%s0 + $0x10] sm:$0xf]
    %v46 = vld [vmem:[#allocation2 + $0x78] sm:$0xff]
    %vm47 = vcmask 162816
    %v49 = vsel %vm47, %v34, 0
    %v52 = vsel %vm47, %v35, 0
    %v55 = vsel %vm47, %v36, 0
    %vm57 = vcmask 1043456
    %v59 = vsel %vm57, %v45, 0
    %61 = vmatpush.msra.mxu0 0.0
    %62 = vmatpush.msra.mxu0 0.0
    %63 = vmatpush.msra.mxu0 0.0
    %64 = vmatpush.msra.mxu0 0.0
    %65 = vmatpush.msra.mxu0 0.0
    %66 = vmatpush.msra.mxu0 0.0
    %67 = vmatpush.msra.mxu0 0.0
    %68 = vmatpush.msra.mxu0 0.0
    %69 = vmatpush.msra.mxu0 0.0
    %70 = vmatpush.msra.mxu0 0.0
    %71 = vmatpush.msra.mxu0 0.0
    %72 = vmatpush.msra.mxu0 0.0
    %73 = vmatpush.msra.mxu0 0.0
    %74 = vmatpush.msra.mxu0 %v59
    %75 = vmatpush.msra.mxu0 %v44
    %76 = vmatpush.msra.mxu0 %v43
    %77 = vmatmul.f32.gmra.mxu0 %v49
    %v78 = vpop.f32.mrf.mxu0
    %v79 = vadd.f32 0.0, %v78
    %80 = vmatmul.f32.gmra.mxu0 %v52
    %v81 = vpop.f32.mrf.mxu0
    %v82 = vadd.f32 0.0, %v81
    %83 = vmatmul.f32.gmra.mxu0 %v55
    %v84 = vpop.f32.mrf.mxu0
    %v85 = vadd.f32 0.0, %v84
    %86 = vdwg.mxu0
    %v87 = vld [vmem:[#allocation2 + $0x68] sm:$0xff]
    %vm88 = vcmask 64512
    %v90 = vsel %vm88, %v79, 0
    %v93 = vsel %vm88, %v82, 0
    %v96 = vsel %vm88, %v85, 0
    %98 = vmatpush.msra.mxu0 0.0
    %99 = vmatpush.msra.mxu0 0.0
    %100 = vmatpush.msra.mxu0 0.0
    %101 = vmatpush.msra.mxu0 0.0
    %102 = vmatpush.msra.mxu0 0.0
    %103 = vmatpush.msra.mxu0 0.0
    %104 = vmatpush.msra.mxu0 0.0
    %105 = vmatpush.msra.mxu0 0.0
    %106 = vmatpush.msra.mxu0 0.0
    %107 = vmatpush.msra.mxu0 0.0
    %108 = vmatpush.msra.mxu0 0.0
    %109 = vmatpush.msra.mxu0 0.0
    %110 = vmatpush.msra.mxu0 0.0
    %111 = vmatpush.msra.mxu0 0.0
    %112 = vmatpush.msra.mxu0 0.0
    %113 = vmatpush.msra.mxu0 %v87
    %114 = vmatmul.f32.gmra.mxu0 %v90
    %v115 = vpop.f32.mrf.mxu0
    %v116 = vadd.f32 0.0, %v115
    %117 = vmatmul.f32.gmra.mxu0 %v93
    %v118 = vpop.f32.mrf.mxu0
    %v119 = vadd.f32 0.0, %v118
    %120 = vmatmul.f32.gmra.mxu0 %v96
    %v121 = vpop.f32.mrf.mxu0
    %v122 = vadd.f32 0.0, %v121
    %123 = vdwg.mxu0
    %v125 = vsel %vm88, %v43, 0
    %v128 = vsel %vm88, %v44, 0
    %v130 = vsel %vm88, %v45, 0
    %132 = vmatpush.msra.mxu0 0.0
    %133 = vmatpush.msra.mxu0 0.0
    %134 = vmatpush.msra.mxu0 0.0
    %135 = vmatpush.msra.mxu0 0.0
    %136 = vmatpush.msra.mxu0 0.0
    %137 = vmatpush.msra.mxu0 0.0
    %138 = vmatpush.msra.mxu0 0.0
    %139 = vmatpush.msra.mxu0 0.0
    %140 = vmatpush.msra.mxu0 0.0
    %141 = vmatpush.msra.mxu0 0.0
    %142 = vmatpush.msra.mxu0 0.0
    %143 = vmatpush.msra.mxu0 0.0
    %144 = vmatpush.msra.mxu0 0.0
    %145 = vmatpush.msra.mxu0 0.0
    %146 = vmatpush.msra.mxu0 0.0
    %147 = vmatpush.msra.mxu0 %v46
    %148 = vmatmul.f32.gmra.mxu0 %v125
    %v149 = vpop.f32.mrf.mxu0
    %v150 = vadd.f32 %v116, %v149
    %151 = vmatmul.f32.gmra.mxu0 %v128
    %v152 = vpop.f32.mrf.mxu0
    %v153 = vadd.f32 %v119, %v152
    %154 = vmatmul.f32.gmra.mxu0 %v130
    %v155 = vpop.f32.mrf.mxu0
    %v156 = vadd.f32 %v122, %v155
    %157 = vdwg.mxu0
    %v159 = vsel %vm47, %v31, 0
    %v162 = vsel %vm47, %v32, 0
    %v165 = vsel %vm47, %v33, 0
    %167 = vmatpush.msra.mxu0 0.0
    %168 = vmatpush.msra.mxu0 0.0
    %169 = vmatpush.msra.mxu0 0.0
    %170 = vmatpush.msra.mxu0 0.0
    %171 = vmatpush.msra.mxu0 0.0
    %172 = vmatpush.msra.mxu0 0.0
    %173 = vmatpush.msra.mxu0 0.0
    %174 = vmatpush.msra.mxu0 0.0
    %175 = vmatpush.msra.mxu0 0.0
    %176 = vmatpush.msra.mxu0 0.0
    %177 = vmatpush.msra.mxu0 0.0
    %178 = vmatpush.msra.mxu0 0.0
    %179 = vmatpush.msra.mxu0 0.0
    %180 = vmatpush.msra.mxu0 %v59
    %181 = vmatpush.msra.mxu0 %v44
    %182 = vmatpush.msra.mxu0 %v43
    %183 = vmatmul.f32.gmra.mxu0 %v159
    %v184 = vpop.f32.mrf.mxu0
    %v185 = vadd.f32 0.0, %v184
    %186 = vmatmul.f32.gmra.mxu0 %v162
    %v187 = vpop.f32.mrf.mxu0
    %v188 = vadd.f32 0.0, %v187
    %189 = vmatmul.f32.gmra.mxu0 %v165
    %v190 = vpop.f32.mrf.mxu0
    %v191 = vadd.f32 0.0, %v190
    %192 = vdwg.mxu0
    %v193 = vld [vmem:[#allocation2 + $0x70] sm:$0xff]
    %v195 = vsel %vm88, %v185, 0
    %v198 = vsel %vm88, %v188, 0
    %v201 = vsel %vm88, %v191, 0
    %203 = vmatpush.msra.mxu0 0.0
    %204 = vmatpush.msra.mxu0 0.0
    %205 = vmatpush.msra.mxu0 0.0
    %206 = vmatpush.msra.mxu0 0.0
    %207 = vmatpush.msra.mxu0 0.0
    %208 = vmatpush.msra.mxu0 0.0
    %209 = vmatpush.msra.mxu0 0.0
    %210 = vmatpush.msra.mxu0 0.0
    %211 = vmatpush.msra.mxu0 0.0
    %212 = vmatpush.msra.mxu0 0.0
    %213 = vmatpush.msra.mxu0 0.0
    %214 = vmatpush.msra.mxu0 0.0
    %215 = vmatpush.msra.mxu0 0.0
    %216 = vmatpush.msra.mxu0 0.0
    %217 = vmatpush.msra.mxu0 0.0
    %218 = vmatpush.msra.mxu0 %v193
    %219 = vmatmul.f32.gmra.mxu0 %v195
    %v220 = vpop.f32.mrf.mxu0
    %v221 = vadd.f32 0.0, %v220
    %222 = vmatmul.f32.gmra.mxu0 %v198
    %v223 = vpop.f32.mrf.mxu0
    %v224 = vadd.f32 0.0, %v223
    %225 = vmatmul.f32.gmra.mxu0 %v201
    %v226 = vpop.f32.mrf.mxu0
    %v227 = vadd.f32 0.0, %v226
    %228 = vdwg.mxu0
    %v229 = vadd.f32 %v150, %v221
    %v230 = vadd.f32 %v153, %v224
    %v231 = vadd.f32 %v156, %v227
    %v232 = vld [vmem:[#allocation2 + $0x80] sm:$0x1]
    %v233 = vperm.slane %v232, 0
    %v234 = vadd.f32 %v229, %v233
    %v235 = vadd.f32 %v230, %v233
    %v236 = vadd.f32 %v231, %v233
    %v237 = vmax.f32 %v234, 0.0
    %v238 = vmax.f32 %v235, 0.0
    %v239 = vmax.f32 %v236, 0.0
    %v240 = vld [vmem:[#allocation2 + $0xf8] sm:$0xff]
    %v241 = vld [vmem:[#allocation2 + $0x100] sm:$0xff]
    %v242 = vld [vmem:[#allocation2 + $0x108] sm:$0xff]
    %v243 = vld [vmem:[#allocation2 + $0x110] sm:$0xff]
    %v244 = vld [vmem:[#allocation2 + $0x118] sm:$0xff]
    %v245 = vld [vmem:[#allocation2 + $0x120] sm:$0xff]
    %v246 = vld [vmem:[#allocation2 + $0x128] sm:$0x3]
    %v248 = vsel %vm57, %v239, 0
    %250 = vmatpush.msra.mxu0 0.0
    %251 = vmatpush.msra.mxu0 0.0
    %252 = vmatpush.msra.mxu0 0.0
    %253 = vmatpush.msra.mxu0 0.0
    %254 = vmatpush.msra.mxu0 0.0
    %255 = vmatpush.msra.mxu0 0.0
    %256 = vmatpush.msra.mxu0 0.0
    %257 = vmatpush.msra.mxu0 0.0
    %258 = vmatpush.msra.mxu0 0.0
    %259 = vmatpush.msra.mxu0 0.0
    %260 = vmatpush.msra.mxu0 0.0
    %261 = vmatpush.msra.mxu0 0.0
    %262 = vmatpush.msra.mxu0 0.0
    %263 = vmatpush.msra.mxu0 %v248
    %264 = vmatpush.msra.mxu0 %v238
    %265 = vmatpush.msra.mxu0 %v237
    %266 = vmatmul.f32.gmra.mxu0 %v49
    %v267 = vpop.f32.mrf.mxu0
    %v268 = vadd.f32 0.0, %v267
    %269 = vmatmul.f32.gmra.mxu0 %v52
    %v270 = vpop.f32.mrf.mxu0
    %v271 = vadd.f32 0.0, %v270
    %272 = vmatmul.f32.gmra.mxu0 %v55
    %v273 = vpop.f32.mrf.mxu0
    %v274 = vadd.f32 0.0, %v273
    %275 = vdwg.mxu0
    %v276 = vld [vmem:[#allocation2 + $0x88] sm:$0xff]
    %v277 = vld [vmem:[#allocation2 + $0x90] sm:$0xff]
    %v278 = vld [vmem:[#allocation2 + $0x98] sm:$0xff]
    %v279 = vld [vmem:[#allocation2 + $0xa0] sm:$0xff]
    %v280 = vld [vmem:[#allocation2 + $0xa8] sm:$0xff]
    %v281 = vld [vmem:[#allocation2 + $0xb0] sm:$0xff]
    %v282 = vld [vmem:[#allocation2 + $0xb8] sm:$0x3]
    %vm283 = vcmask 408576
    %v285 = vsel %vm283, %v268, 0
    %v288 = vsel %vm283, %v271, 0
    %v291 = vsel %vm283, %v274, 0
    %vm293 = vcmask 1041408
    %v295 = vsel %vm293, %v282, 0
    %297 = vmatpush.msra.mxu0 0.0
    %298 = vmatpush.msra.mxu0 0.0
    %299 = vmatpush.msra.mxu0 0.0
    %300 = vmatpush.msra.mxu0 0.0
    %301 = vmatpush.msra.mxu0 0.0
    %302 = vmatpush.msra.mxu0 0.0
    %303 = vmatpush.msra.mxu0 0.0
    %304 = vmatpush.msra.mxu0 0.0
    %305 = vmatpush.msra.mxu0 0.0
    %306 = vmatpush.msra.mxu0 %v295
    %307 = vmatpush.msra.mxu0 %v281
    %308 = vmatpush.msra.mxu0 %v280
    %309 = vmatpush.msra.mxu0 %v279
    %310 = vmatpush.msra.mxu0 %v278
    %311 = vmatpush.msra.mxu0 %v277
    %312 = vmatpush.msra.mxu0 %v276
    %313 = vmatmul.f32.gmra.mxu0 %v285
    %v314 = vpop.f32.mrf.mxu0
    %v315 = vadd.f32 0.0, %v314
    %316 = vmatmul.f32.gmra.mxu0 %v288
    %v317 = vpop.f32.mrf.mxu0
    %v318 = vadd.f32 0.0, %v317
    %319 = vmatmul.f32.gmra.mxu0 %v291
    %v320 = vpop.f32.mrf.mxu0
    %v321 = vadd.f32 0.0, %v320
    %322 = vdwg.mxu0
    %v324 = vsel %vm283, %v237, 0
    %v327 = vsel %vm283, %v238, 0
    %v329 = vsel %vm283, %v239, 0
    %v332 = vsel %vm293, %v246, 0
    %334 = vmatpush.msra.mxu0 0.0
    %335 = vmatpush.msra.mxu0 0.0
    %336 = vmatpush.msra.mxu0 0.0
    %337 = vmatpush.msra.mxu0 0.0
    %338 = vmatpush.msra.mxu0 0.0
    %339 = vmatpush.msra.mxu0 0.0
    %340 = vmatpush.msra.mxu0 0.0
    %341 = vmatpush.msra.mxu0 0.0
    %342 = vmatpush.msra.mxu0 0.0
    %343 = vmatpush.msra.mxu0 %v332
    %344 = vmatpush.msra.mxu0 %v245
    %345 = vmatpush.msra.mxu0 %v244
    %346 = vmatpush.msra.mxu0 %v243
    %347 = vmatpush.msra.mxu0 %v242
    %348 = vmatpush.msra.mxu0 %v241
    %349 = vmatpush.msra.mxu0 %v240
    %350 = vmatmul.f32.gmra.mxu0 %v324
    %v351 = vpop.f32.mrf.mxu0
    %v352 = vadd.f32 %v315, %v351
    %353 = vmatmul.f32.gmra.mxu0 %v327
    %v354 = vpop.f32.mrf.mxu0
    %v355 = vadd.f32 %v318, %v354
    %356 = vmatmul.f32.gmra.mxu0 %v329
    %v357 = vpop.f32.mrf.mxu0
    %v358 = vadd.f32 %v321, %v357
    %359 = vdwg.mxu0
    %360 = vmatpush.msra.mxu0 0.0
    %361 = vmatpush.msra.mxu0 0.0
    %362 = vmatpush.msra.mxu0 0.0
    %363 = vmatpush.msra.mxu0 0.0
    %364 = vmatpush.msra.mxu0 0.0
    %365 = vmatpush.msra.mxu0 0.0
    %366 = vmatpush.msra.mxu0 0.0
    %367 = vmatpush.msra.mxu0 0.0
    %368 = vmatpush.msra.mxu0 0.0
    %369 = vmatpush.msra.mxu0 0.0
    %370 = vmatpush.msra.mxu0 0.0
    %371 = vmatpush.msra.mxu0 0.0
    %372 = vmatpush.msra.mxu0 0.0
    %373 = vmatpush.msra.mxu0 %v248
    %374 = vmatpush.msra.mxu0 %v238
    %375 = vmatpush.msra.mxu0 %v237
    %376 = vmatmul.f32.gmra.mxu0 %v159
    %v377 = vpop.f32.mrf.mxu0
    %v378 = vadd.f32 0.0, %v377
    %379 = vmatmul.f32.gmra.mxu0 %v162
    %v380 = vpop.f32.mrf.mxu0
    %v381 = vadd.f32 0.0, %v380
    %382 = vmatmul.f32.gmra.mxu0 %v165
    %v383 = vpop.f32.mrf.mxu0
    %v384 = vadd.f32 0.0, %v383
    %385 = vdwg.mxu0
    %v386 = vld [vmem:[#allocation2 + $0xc0] sm:$0xff]
    %v387 = vld [vmem:[#allocation2 + $0xc8] sm:$0xff]
    %v388 = vld [vmem:[#allocation2 + $0xd0] sm:$0xff]
    %v389 = vld [vmem:[#allocation2 + $0xd8] sm:$0xff]
    %v390 = vld [vmem:[#allocation2 + $0xe0] sm:$0xff]
    %v391 = vld [vmem:[#allocation2 + $0xe8] sm:$0xff]
    %v392 = vld [vmem:[#allocation2 + $0xf0] sm:$0x3]
    %v394 = vsel %vm283, %v378, 0
    %v397 = vsel %vm283, %v381, 0
    %v400 = vsel %vm283, %v384, 0
    %v403 = vsel %vm293, %v392, 0
    %405 = vmatpush.msra.mxu0 0.0
    %406 = vmatpush.msra.mxu0 0.0
    %407 = vmatpush.msra.mxu0 0.0
    %408 = vmatpush.msra.mxu0 0.0
    %409 = vmatpush.msra.mxu0 0.0
    %410 = vmatpush.msra.mxu0 0.0
    %411 = vmatpush.msra.mxu0 0.0
    %412 = vmatpush.msra.mxu0 0.0
    %413 = vmatpush.msra.mxu0 0.0
    %414 = vmatpush.msra.mxu0 %v403
    %415 = vmatpush.msra.mxu0 %v391
    %416 = vmatpush.msra.mxu0 %v390
    %417 = vmatpush.msra.mxu0 %v389
    %418 = vmatpush.msra.mxu0 %v388
    %419 = vmatpush.msra.mxu0 %v387
    %420 = vmatpush.msra.mxu0 %v386
    %421 = vmatmul.f32.gmra.mxu0 %v394
    %v422 = vpop.f32.mrf.mxu0
    %v423 = vadd.f32 0.0, %v422
    %424 = vmatmul.f32.gmra.mxu0 %v397
    %v425 = vpop.f32.mrf.mxu0
    %v426 = vadd.f32 0.0, %v425
    %427 = vmatmul.f32.gmra.mxu0 %v400
    %v428 = vpop.f32.mrf.mxu0
    %v429 = vadd.f32 0.0, %v428
    %430 = vdwg.mxu0
    %v431 = vadd.f32 %v352, %v423
    %v432 = vadd.f32 %v355, %v426
    %v433 = vadd.f32 %v358, %v429
    %v434 = vld [vmem:[#allocation2 + $0x130] sm:$0x1]
    %v435 = vperm.slane %v434, 0
    %v436 = vadd.f32 %v431, %v435
    %v437 = vadd.f32 %v432, %v435
    %v438 = vadd.f32 %v433, %v435
    %v439 = vmax.f32 %v436, 0.0
    %v440 = vmax.f32 %v437, 0.0
    %v441 = vmax.f32 %v438, 0.0
    %v442 = vld [vmem:[#allocation2 + $0x138] sm:$0xff]
    %v443 = vld [vmem:[#allocation2 + $0x140] sm:$0x1]
    %v444 = vperm.slane %v443, 0
    %445 = vmatpush.msra.mxu0 0.0
    %446 = vmatpush.msra.mxu0 0.0
    %447 = vmatpush.msra.mxu0 0.0
    %448 = vmatpush.msra.mxu0 0.0
    %449 = vmatpush.msra.mxu0 0.0
    %450 = vmatpush.msra.mxu0 0.0
    %451 = vmatpush.msra.mxu0 0.0
    %452 = vmatpush.msra.mxu0 0.0
    %453 = vmatpush.msra.mxu0 0.0
    %454 = vmatpush.msra.mxu0 0.0
    %455 = vmatpush.msra.mxu0 0.0
    %456 = vmatpush.msra.mxu0 0.0
    %457 = vmatpush.msra.mxu0 0.0
    %458 = vmatpush.msra.mxu0 0.0
    %459 = vmatpush.msra.mxu0 0.0
    %460 = vmatpush.msra.mxu0 %v442
    %461 = vmatmul.f32.gmra.mxu0 %v125
    %v462 = vpop.f32.mrf.mxu0
    %v463 = vadd.f32 %v444, %v462
    %464 = vmatmul.f32.gmra.mxu0 %v128
    %v465 = vpop.f32.mrf.mxu0
    %v466 = vadd.f32 %v444, %v465
    %467 = vmatmul.f32.gmra.mxu0 %v130
    %v468 = vpop.f32.mrf.mxu0
    %v469 = vadd.f32 %v444, %v468
    %470 = vdwg.mxu0
    %v471 = vadd.f32 %v439, %v463
    %v472 = vadd.f32 %v440, %v466
    %v473 = vadd.f32 %v441, %v469
    %v474 = vmax.f32 %v471, 0.0
    %v475 = vmax.f32 %v472, 0.0
    %v476 = vmax.f32 %v473, 0.0
    %v477 = vld [vmem:[#allocation2 + $0x1b8] sm:$0xff]
    %v478 = vld [vmem:[#allocation2 + $0x1c0] sm:$0xff]
    %v479 = vld [vmem:[#allocation2 + $0x1c8] sm:$0xff]
    %v480 = vld [vmem:[#allocation2 + $0x1d0] sm:$0xff]
    %v481 = vld [vmem:[#allocation2 + $0x1d8] sm:$0xff]
    %v482 = vld [vmem:[#allocation2 + $0x1e0] sm:$0xff]
    %v483 = vld [vmem:[#allocation2 + $0x1e8] sm:$0x3]
    %v485 = vsel %vm47, %v37, 0
    %v488 = vsel %vm47, %v38, 0
    %v491 = vsel %vm47, %v39, 0
    %v494 = vsel %vm57, %v476, 0
    %496 = vmatpush.msra.mxu0 0.0
    %497 = vmatpush.msra.mxu0 0.0
    %498 = vmatpush.msra.mxu0 0.0
    %499 = vmatpush.msra.mxu0 0.0
    %500 = vmatpush.msra.mxu0 0.0
    %501 = vmatpush.msra.mxu0 0.0
    %502 = vmatpush.msra.mxu0 0.0
    %503 = vmatpush.msra.mxu0 0.0
    %504 = vmatpush.msra.mxu0 0.0
    %505 = vmatpush.msra.mxu0 0.0
    %506 = vmatpush.msra.mxu0 0.0
    %507 = vmatpush.msra.mxu0 0.0
    %508 = vmatpush.msra.mxu0 0.0
    %509 = vmatpush.msra.mxu0 %v494
    %510 = vmatpush.msra.mxu0 %v475
    %511 = vmatpush.msra.mxu0 %v474
    %512 = vmatmul.f32.gmra.mxu0 %v485
    %v513 = vpop.f32.mrf.mxu0
    %v514 = vadd.f32 0.0, %v513
    %515 = vmatmul.f32.gmra.mxu0 %v488
    %v516 = vpop.f32.mrf.mxu0
    %v517 = vadd.f32 0.0, %v516
    %518 = vmatmul.f32.gmra.mxu0 %v491
    %v519 = vpop.f32.mrf.mxu0
    %v520 = vadd.f32 0.0, %v519
    %521 = vdwg.mxu0
    %v522 = vld [vmem:[#allocation2 + $0x148] sm:$0xff]
    %v523 = vld [vmem:[#allocation2 + $0x150] sm:$0xff]
    %v524 = vld [vmem:[#allocation2 + $0x158] sm:$0xff]
    %v525 = vld [vmem:[#allocation2 + $0x160] sm:$0xff]
    %v526 = vld [vmem:[#allocation2 + $0x168] sm:$0xff]
    %v527 = vld [vmem:[#allocation2 + $0x170] sm:$0xff]
    %v528 = vld [vmem:[#allocation2 + $0x178] sm:$0x3]
    %v530 = vsel %vm283, %v514, 0
    %v533 = vsel %vm283, %v517, 0
    %v536 = vsel %vm283, %v520, 0
    %v539 = vsel %vm293, %v528, 0
    %541 = vmatpush.msra.mxu0 0.0
    %542 = vmatpush.msra.mxu0 0.0
    %543 = vmatpush.msra.mxu0 0.0
    %544 = vmatpush.msra.mxu0 0.0
    %545 = vmatpush.msra.mxu0 0.0
    %546 = vmatpush.msra.mxu0 0.0
    %547 = vmatpush.msra.mxu0 0.0
    %548 = vmatpush.msra.mxu0 0.0
    %549 = vmatpush.msra.mxu0 0.0
    %550 = vmatpush.msra.mxu0 %v539
    %551 = vmatpush.msra.mxu0 %v527
    %552 = vmatpush.msra.mxu0 %v526
    %553 = vmatpush.msra.mxu0 %v525
    %554 = vmatpush.msra.mxu0 %v524
    %555 = vmatpush.msra.mxu0 %v523
    %556 = vmatpush.msra.mxu0 %v522
    %557 = vmatmul.f32.gmra.mxu0 %v530
    %v558 = vpop.f32.mrf.mxu0
    %v559 = vadd.f32 0.0, %v558
    %560 = vmatmul.f32.gmra.mxu0 %v533
    %v561 = vpop.f32.mrf.mxu0
    %v562 = vadd.f32 0.0, %v561
    %563 = vmatmul.f32.gmra.mxu0 %v536
    %v564 = vpop.f32.mrf.mxu0
    %v565 = vadd.f32 0.0, %v564
    %566 = vdwg.mxu0
    %v568 = vsel %vm283, %v474, 0
    %v571 = vsel %vm283, %v475, 0
    %v573 = vsel %vm283, %v476, 0
    %v576 = vsel %vm293, %v483, 0
    %578 = vmatpush.msra.mxu0 0.0
    %579 = vmatpush.msra.mxu0 0.0
    %580 = vmatpush.msra.mxu0 0.0
    %581 = vmatpush.msra.mxu0 0.0
    %582 = vmatpush.msra.mxu0 0.0
    %583 = vmatpush.msra.mxu0 0.0
    %584 = vmatpush.msra.mxu0 0.0
    %585 = vmatpush.msra.mxu0 0.0
    %586 = vmatpush.msra.mxu0 0.0
    %587 = vmatpush.msra.mxu0 %v576
    %588 = vmatpush.msra.mxu0 %v482
    %589 = vmatpush.msra.mxu0 %v481
    %590 = vmatpush.msra.mxu0 %v480
    %591 = vmatpush.msra.mxu0 %v479
    %592 = vmatpush.msra.mxu0 %v478
    %593 = vmatpush.msra.mxu0 %v477
    %594 = vmatmul.f32.gmra.mxu0 %v568
    %v595 = vpop.f32.mrf.mxu0
    %v596 = vadd.f32 %v559, %v595
    %597 = vmatmul.f32.gmra.mxu0 %v571
    %v598 = vpop.f32.mrf.mxu0
    %v599 = vadd.f32 %v562, %v598
    %600 = vmatmul.f32.gmra.mxu0 %v573
    %v601 = vpop.f32.mrf.mxu0
    %v602 = vadd.f32 %v565, %v601
    %603 = vdwg.mxu0
    %604 = vmatpush.msra.mxu0 0.0
    %605 = vmatpush.msra.mxu0 0.0
    %606 = vmatpush.msra.mxu0 0.0
    %607 = vmatpush.msra.mxu0 0.0
    %608 = vmatpush.msra.mxu0 0.0
    %609 = vmatpush.msra.mxu0 0.0
    %610 = vmatpush.msra.mxu0 0.0
    %611 = vmatpush.msra.mxu0 0.0
    %612 = vmatpush.msra.mxu0 0.0
    %613 = vmatpush.msra.mxu0 0.0
    %614 = vmatpush.msra.mxu0 0.0
    %615 = vmatpush.msra.mxu0 0.0
    %616 = vmatpush.msra.mxu0 0.0
    %617 = vmatpush.msra.mxu0 %v494
    %618 = vmatpush.msra.mxu0 %v475
    %619 = vmatpush.msra.mxu0 %v474
    %620 = vmatmul.f32.gmra.mxu0 %v49
    %v621 = vpop.f32.mrf.mxu0
    %v622 = vadd.f32 0.0, %v621
    %623 = vmatmul.f32.gmra.mxu0 %v52
    %v624 = vpop.f32.mrf.mxu0
    %v625 = vadd.f32 0.0, %v624
    %626 = vmatmul.f32.gmra.mxu0 %v55
    %v627 = vpop.f32.mrf.mxu0
    %v628 = vadd.f32 0.0, %v627
    %629 = vdwg.mxu0
    %v630 = vld [vmem:[#allocation2 + $0x180] sm:$0xff]
    %v631 = vld [vmem:[#allocation2 + $0x188] sm:$0xff]
    %v632 = vld [vmem:[#allocation2 + $0x190] sm:$0xff]
    %v633 = vld [vmem:[#allocation2 + $0x198] sm:$0xff]
    %v634 = vld [vmem:[#allocation2 + $0x1a0] sm:$0xff]
    %v635 = vld [vmem:[#allocation2 + $0x1a8] sm:$0xff]
    %v636 = vld [vmem:[#allocation2 + $0x1b0] sm:$0x3]
    %v638 = vsel %vm283, %v622, 0
    %v641 = vsel %vm283, %v625, 0
    %v644 = vsel %vm283, %v628, 0
    %v647 = vsel %vm293, %v636, 0
    %649 = vmatpush.msra.mxu0 0.0
    %650 = vmatpush.msra.mxu0 0.0
    %651 = vmatpush.msra.mxu0 0.0
    %652 = vmatpush.msra.mxu0 0.0
    %653 = vmatpush.msra.mxu0 0.0
    %654 = vmatpush.msra.mxu0 0.0
    %655 = vmatpush.msra.mxu0 0.0
    %656 = vmatpush.msra.mxu0 0.0
    %657 = vmatpush.msra.mxu0 0.0
    %658 = vmatpush.msra.mxu0 %v647
    %659 = vmatpush.msra.mxu0 %v635
    %660 = vmatpush.msra.mxu0 %v634
    %661 = vmatpush.msra.mxu0 %v633
    %662 = vmatpush.msra.mxu0 %v632
    %663 = vmatpush.msra.mxu0 %v631
    %664 = vmatpush.msra.mxu0 %v630
    %665 = vmatmul.f32.gmra.mxu0 %v638
    %v666 = vpop.f32.mrf.mxu0
    %v667 = vadd.f32 0.0, %v666
    %668 = vmatmul.f32.gmra.mxu0 %v641
    %v669 = vpop.f32.mrf.mxu0
    %v670 = vadd.f32 0.0, %v669
    %671 = vmatmul.f32.gmra.mxu0 %v644
    %v672 = vpop.f32.mrf.mxu0
    %v673 = vadd.f32 0.0, %v672
    %674 = vdwg.mxu0
    %v675 = vadd.f32 %v596, %v667
    %v676 = vadd.f32 %v599, %v670
    %v677 = vadd.f32 %v602, %v673
    %v678 = vld [vmem:[#allocation2 + $0x1f0] sm:$0x1]
    %v679 = vperm.slane %v678, 0
    %v680 = vadd.f32 %v675, %v679
    %v681 = vadd.f32 %v676, %v679
    %v682 = vadd.f32 %v677, %v679
    %v683 = vmax.f32 %v680, 0.0
    %v684 = vmax.f32 %v681, 0.0
    %v685 = vmax.f32 %v682, 0.0
    %v686 = vld [vmem:[#allocation2 + $0x2c8] sm:$0xff]
    %v687 = vld [vmem:[#allocation2 + $0x2d0] sm:$0xff]
    %v688 = vld [vmem:[#allocation2 + $0x2d8] sm:$0xff]
    %v689 = vld [vmem:[#allocation2 + $0x2e0] sm:$0xff]
    %v690 = vld [vmem:[#allocation2 + $0x2e8] sm:$0xff]
    %v691 = vld [vmem:[#allocation2 + $0x2f0] sm:$0xff]
    %v692 = vld [vmem:[#allocation2 + $0x2f8] sm:$0xff]
    %v693 = vld [vmem:[#allocation2 + $0x300] sm:$0xff]
    %v694 = vld [vmem:[#allocation2 + $0x308] sm:$0xff]
    %v695 = vld [vmem:[#allocation2 + $0x310] sm:$0xff]
    %v696 = vld [vmem:[#allocation2 + $0x318] sm:$0xff]
    %v697 = vld [vmem:[#allocation2 + $0x320] sm:$0xff]
    %v698 = vld [vmem:[#allocation2 + $0x328] sm:$0xf]
    %v700 = vsel %vm57, %v685, 0
    %702 = vmatpush.msra.mxu0 0.0
    %703 = vmatpush.msra.mxu0 0.0
    %704 = vmatpush.msra.mxu0 0.0
    %705 = vmatpush.msra.mxu0 0.0
    %706 = vmatpush.msra.mxu0 0.0
    %707 = vmatpush.msra.mxu0 0.0
    %708 = vmatpush.msra.mxu0 0.0
    %709 = vmatpush.msra.mxu0 0.0
    %710 = vmatpush.msra.mxu0 0.0
    %711 = vmatpush.msra.mxu0 0.0
    %712 = vmatpush.msra.mxu0 0.0
    %713 = vmatpush.msra.mxu0 0.0
    %714 = vmatpush.msra.mxu0 0.0
    %715 = vmatpush.msra.mxu0 %v700
    %716 = vmatpush.msra.mxu0 %v684
    %717 = vmatpush.msra.mxu0 %v683
    %718 = vmatmul.f32.gmra.mxu0 %v485
    %v719 = vpop.f32.mrf.mxu0
    %v720 = vadd.f32 0.0, %v719
    %721 = vmatmul.f32.gmra.mxu0 %v488
    %v722 = vpop.f32.mrf.mxu0
    %v723 = vadd.f32 0.0, %v722
    %724 = vmatmul.f32.gmra.mxu0 %v491
    %v725 = vpop.f32.mrf.mxu0
    %v726 = vadd.f32 0.0, %v725
    %727 = vdwg.mxu0
    %v728 = vld [vmem:[#allocation2 + $0x1f8] sm:$0xff]
    %v729 = vld [vmem:[#allocation2 + $0x200] sm:$0xff]
    %v730 = vld [vmem:[#allocation2 + $0x208] sm:$0xff]
    %v731 = vld [vmem:[#allocation2 + $0x210] sm:$0xff]
    %v732 = vld [vmem:[#allocation2 + $0x218] sm:$0xff]
    %v733 = vld [vmem:[#allocation2 + $0x220] sm:$0xff]
    %v734 = vld [vmem:[#allocation2 + $0x228] sm:$0xff]
    %v735 = vld [vmem:[#allocation2 + $0x230] sm:$0xff]
    %v736 = vld [vmem:[#allocation2 + $0x238] sm:$0xff]
    %v737 = vld [vmem:[#allocation2 + $0x240] sm:$0xff]
    %v738 = vld [vmem:[#allocation2 + $0x248] sm:$0xff]
    %v739 = vld [vmem:[#allocation2 + $0x250] sm:$0xff]
    %v740 = vld [vmem:[#allocation2 + $0x258] sm:$0xf]
    %vm741 = vcmask 818176
    %v743 = vsel %vm741, %v720, 0
    %v746 = vsel %vm741, %v723, 0
    %v749 = vsel %vm741, %v726, 0
    %v752 = vsel %vm57, %v740, 0
    %754 = vmatpush.msra.mxu0 0.0
    %755 = vmatpush.msra.mxu0 0.0
    %756 = vmatpush.msra.mxu0 0.0
    %757 = vmatpush.msra.mxu0 %v752
    %758 = vmatpush.msra.mxu0 %v739
    %759 = vmatpush.msra.mxu0 %v738
    %760 = vmatpush.msra.mxu0 %v737
    %761 = vmatpush.msra.mxu0 %v736
    %762 = vmatpush.msra.mxu0 %v735
    %763 = vmatpush.msra.mxu0 %v734
    %764 = vmatpush.msra.mxu0 %v733
    %765 = vmatpush.msra.mxu0 %v732
    %766 = vmatpush.msra.mxu0 %v731
    %767 = vmatpush.msra.mxu0 %v730
    %768 = vmatpush.msra.mxu0 %v729
    %769 = vmatpush.msra.mxu0 %v728
    %770 = vmatmul.f32.gmra.mxu0 %v743
    %v771 = vpop.f32.mrf.mxu0
    %v772 = vadd.f32 0.0, %v771
    %773 = vmatmul.f32.gmra.mxu0 %v746
    %v774 = vpop.f32.mrf.mxu0
    %v775 = vadd.f32 0.0, %v774
    %776 = vmatmul.f32.gmra.mxu0 %v749
    %v777 = vpop.f32.mrf.mxu0
    %v778 = vadd.f32 0.0, %v777
    %779 = vdwg.mxu0
    %v781 = vsel %vm741, %v683, 0
    %v784 = vsel %vm741, %v684, 0
    %v786 = vsel %vm741, %v685, 0
    %v789 = vsel %vm57, %v698, 0
    %791 = vmatpush.msra.mxu0 0.0
    %792 = vmatpush.msra.mxu0 0.0
    %793 = vmatpush.msra.mxu0 0.0
    %794 = vmatpush.msra.mxu0 %v789
    %795 = vmatpush.msra.mxu0 %v697
    %796 = vmatpush.msra.mxu0 %v696
    %797 = vmatpush.msra.mxu0 %v695
    %798 = vmatpush.msra.mxu0 %v694
    %799 = vmatpush.msra.mxu0 %v693
    %800 = vmatpush.msra.mxu0 %v692
    %801 = vmatpush.msra.mxu0 %v691
    %802 = vmatpush.msra.mxu0 %v690
    %803 = vmatpush.msra.mxu0 %v689
    %804 = vmatpush.msra.mxu0 %v688
    %805 = vmatpush.msra.mxu0 %v687
    %806 = vmatpush.msra.mxu0 %v686
    %807 = vmatmul.f32.gmra.mxu0 %v781
    %v808 = vpop.f32.mrf.mxu0
    %v809 = vadd.f32 %v772, %v808
    %810 = vmatmul.f32.gmra.mxu0 %v784
    %v811 = vpop.f32.mrf.mxu0
    %v812 = vadd.f32 %v775, %v811
    %813 = vmatmul.f32.gmra.mxu0 %v786
    %v814 = vpop.f32.mrf.mxu0
    %v815 = vadd.f32 %v778, %v814
    %816 = vdwg.mxu0
    %817 = vmatpush.msra.mxu0 0.0
    %818 = vmatpush.msra.mxu0 0.0
    %819 = vmatpush.msra.mxu0 0.0
    %820 = vmatpush.msra.mxu0 0.0
    %821 = vmatpush.msra.mxu0 0.0
    %822 = vmatpush.msra.mxu0 0.0
    %823 = vmatpush.msra.mxu0 0.0
    %824 = vmatpush.msra.mxu0 0.0
    %825 = vmatpush.msra.mxu0 0.0
    %826 = vmatpush.msra.mxu0 0.0
    %827 = vmatpush.msra.mxu0 0.0
    %828 = vmatpush.msra.mxu0 0.0
    %829 = vmatpush.msra.mxu0 0.0
    %830 = vmatpush.msra.mxu0 %v700
    %831 = vmatpush.msra.mxu0 %v684
    %832 = vmatpush.msra.mxu0 %v683
    %833 = vmatmul.f32.gmra.mxu0 %v49
    %v834 = vpop.f32.mrf.mxu0
    %v835 = vadd.f32 0.0, %v834
    %836 = vmatmul.f32.gmra.mxu0 %v52
    %v837 = vpop.f32.mrf.mxu0
    %v838 = vadd.f32 0.0, %v837
    %839 = vmatmul.f32.gmra.mxu0 %v55
    %v840 = vpop.f32.mrf.mxu0
    %v841 = vadd.f32 0.0, %v840
    %842 = vdwg.mxu0
    %v843 = vld [vmem:[#allocation2 + $0x260] sm:$0xff]
    %v844 = vld [vmem:[#allocation2 + $0x268] sm:$0xff]
    %v845 = vld [vmem:[#allocation2 + $0x270] sm:$0xff]
    %v846 = vld [vmem:[#allocation2 + $0x278] sm:$0xff]
    %v847 = vld [vmem:[#allocation2 + $0x280] sm:$0xff]
    %v848 = vld [vmem:[#allocation2 + $0x288] sm:$0xff]
    %v849 = vld [vmem:[#allocation2 + $0x290] sm:$0xff]
    %v850 = vld [vmem:[#allocation2 + $0x298] sm:$0xff]
    %v851 = vld [vmem:[#allocation2 + $0x2a0] sm:$0xff]
    %v852 = vld [vmem:[#allocation2 + $0x2a8] sm:$0xff]
    %v853 = vld [vmem:[#allocation2 + $0x2b0] sm:$0xff]
    %v854 = vld [vmem:[#allocation2 + $0x2b8] sm:$0xff]
    %v855 = vld [vmem:[#allocation2 + $0x2c0] sm:$0xf]
    %v857 = vsel %vm741, %v835, 0
    %v860 = vsel %vm741, %v838, 0
    %v863 = vsel %vm741, %v841, 0
    %v866 = vsel %vm57, %v855, 0
    %868 = vmatpush.msra.mxu0 0.0
    %869 = vmatpush.msra.mxu0 0.0
    %870 = vmatpush.msra.mxu0 0.0
    %871 = vmatpush.msra.mxu0 %v866
    %872 = vmatpush.msra.mxu0 %v854
    %873 = vmatpush.msra.mxu0 %v853
    %874 = vmatpush.msra.mxu0 %v852
    %875 = vmatpush.msra.mxu0 %v851
    %876 = vmatpush.msra.mxu0 %v850
    %877 = vmatpush.msra.mxu0 %v849
    %878 = vmatpush.msra.mxu0 %v848
    %879 = vmatpush.msra.mxu0 %v847
    %880 = vmatpush.msra.mxu0 %v846
    %881 = vmatpush.msra.mxu0 %v845
    %882 = vmatpush.msra.mxu0 %v844
    %883 = vmatpush.msra.mxu0 %v843
    %884 = vmatmul.f32.gmra.mxu0 %v857
    %v885 = vpop.f32.mrf.mxu0
    %v886 = vadd.f32 0.0, %v885
    %887 = vmatmul.f32.gmra.mxu0 %v860
    %v888 = vpop.f32.mrf.mxu0
    %v889 = vadd.f32 0.0, %v888
    %890 = vmatmul.f32.gmra.mxu0 %v863
    %v891 = vpop.f32.mrf.mxu0
    %v892 = vadd.f32 0.0, %v891
    %893 = vdwg.mxu0
    %v894 = vadd.f32 %v809, %v886
    %v895 = vadd.f32 %v812, %v889
    %v896 = vadd.f32 %v815, %v892
    %v897 = vld [vmem:[#allocation2 + $0x330] sm:$0x1]
    %v898 = vperm.slane %v897, 0
    %v899 = vadd.f32 %v894, %v898
    %v900 = vadd.f32 %v895, %v898
    %v901 = vadd.f32 %v896, %v898
    %v902 = vmax.f32 %v899, 0.0
    %v903 = vmax.f32 %v900, 0.0
    %v904 = vmax.f32 %v901, 0.0
    %v905 = vld [vmem:[#allocation2 + $0x338] sm:$0xff]
    %v906 = vld [vmem:[#allocation2 + $0x340] sm:$0xff]
    %v907 = vld [vmem:[#allocation2 + $0x348] sm:$0xff]
    %v908 = vld [vmem:[#allocation2 + $0x350] sm:$0xff]
    %v909 = vld [vmem:[#allocation2 + $0x358] sm:$0xff]
    %v910 = vld [vmem:[#allocation2 + $0x360] sm:$0xff]
    %v911 = vld [vmem:[#allocation2 + $0x368] sm:$0x3]
    %v912 = vld [vmem:[#allocation2 + $0x370] sm:$0x1]
    %v913 = vperm.slane %v912, 0
    %v915 = vsel %vm293, %v911, 0
    %917 = vmatpush.msra.mxu0 0.0
    %918 = vmatpush.msra.mxu0 0.0
    %919 = vmatpush.msra.mxu0 0.0
    %920 = vmatpush.msra.mxu0 0.0
    %921 = vmatpush.msra.mxu0 0.0
    %922 = vmatpush.msra.mxu0 0.0
    %923 = vmatpush.msra.mxu0 0.0
    %924 = vmatpush.msra.mxu0 0.0
    %925 = vmatpush.msra.mxu0 0.0
    %926 = vmatpush.msra.mxu0 %v915
    %927 = vmatpush.msra.mxu0 %v910
    %928 = vmatpush.msra.mxu0 %v909
    %929 = vmatpush.msra.mxu0 %v908
    %930 = vmatpush.msra.mxu0 %v907
    %931 = vmatpush.msra.mxu0 %v906
    %932 = vmatpush.msra.mxu0 %v905
    %933 = vmatmul.f32.gmra.mxu0 %v568
    %v934 = vpop.f32.mrf.mxu0
    %v935 = vadd.f32 %v913, %v934
    %936 = vmatmul.f32.gmra.mxu0 %v571
    %v937 = vpop.f32.mrf.mxu0
    %v938 = vadd.f32 %v913, %v937
    %939 = vmatmul.f32.gmra.mxu0 %v573
    %v940 = vpop.f32.mrf.mxu0
    %v941 = vadd.f32 %v913, %v940
    %942 = vdwg.mxu0
    %v943 = vadd.f32 %v902, %v935
    %v944 = vadd.f32 %v903, %v938
    %v945 = vadd.f32 %v904, %v941
    %v946 = vmax.f32 %v943, 0.0
    %v947 = vmax.f32 %v944, 0.0
    %v948 = vmax.f32 %v945, 0.0
    %v949 = vld [vmem:[#allocation2 + $0x448] sm:$0xff]
    %v950 = vld [vmem:[#allocation2 + $0x450] sm:$0xff]
    %v951 = vld [vmem:[#allocation2 + $0x458] sm:$0xff]
    %v952 = vld [vmem:[#allocation2 + $0x460] sm:$0xff]
    %v953 = vld [vmem:[#allocation2 + $0x468] sm:$0xff]
    %v954 = vld [vmem:[#allocation2 + $0x470] sm:$0xff]
    %v955 = vld [vmem:[#allocation2 + $0x478] sm:$0xff]
    %v956 = vld [vmem:[#allocation2 + $0x480] sm:$0xff]
    %v957 = vld [vmem:[#allocation2 + $0x488] sm:$0xff]
    %v958 = vld [vmem:[#allocation2 + $0x490] sm:$0xff]
    %v959 = vld [vmem:[#allocation2 + $0x498] sm:$0xff]
    %v960 = vld [vmem:[#allocation2 + $0x4a0] sm:$0xff]
    %v961 = vld [vmem:[#allocation2 + $0x4a8] sm:$0xf]
    %v963 = vsel %vm47, %v40, 0
    %v966 = vsel %vm47, %v41, 0
    %v969 = vsel %vm47, %v42, 0
    %v972 = vsel %vm57, %v948, 0
    %974 = vmatpush.msra.mxu0 0.0
    %975 = vmatpush.msra.mxu0 0.0
    %976 = vmatpush.msra.mxu0 0.0
    %977 = vmatpush.msra.mxu0 0.0
    %978 = vmatpush.msra.mxu0 0.0
    %979 = vmatpush.msra.mxu0 0.0
    %980 = vmatpush.msra.mxu0 0.0
    %981 = vmatpush.msra.mxu0 0.0
    %982 = vmatpush.msra.mxu0 0.0
    %983 = vmatpush.msra.mxu0 0.0
    %984 = vmatpush.msra.mxu0 0.0
    %985 = vmatpush.msra.mxu0 0.0
    %986 = vmatpush.msra.mxu0 0.0
    %987 = vmatpush.msra.mxu0 %v972
    %988 = vmatpush.msra.mxu0 %v947
    %989 = vmatpush.msra.mxu0 %v946
    %990 = vmatmul.f32.gmra.mxu0 %v963
    %v991 = vpop.f32.mrf.mxu0
    %v992 = vadd.f32 0.0, %v991
    %993 = vmatmul.f32.gmra.mxu0 %v966
    %v994 = vpop.f32.mrf.mxu0
    %v995 = vadd.f32 0.0, %v994
    %996 = vmatmul.f32.gmra.mxu0 %v969
    %v997 = vpop.f32.mrf.mxu0
    %v998 = vadd.f32 0.0, %v997
    %999 = vdwg.mxu0
    %v1000 = vld [vmem:[#allocation2 + $0x378] sm:$0xff]
    %v1001 = vld [vmem:[#allocation2 + $0x380] sm:$0xff]
    %v1002 = vld [vmem:[#allocation2 + $0x388] sm:$0xff]
    %v1003 = vld [vmem:[#allocation2 + $0x390] sm:$0xff]
    %v1004 = vld [vmem:[#allocation2 + $0x398] sm:$0xff]
    %v1005 = vld [vmem:[#allocation2 + $0x3a0] sm:$0xff]
    %v1006 = vld [vmem:[#allocation2 + $0x3a8] sm:$0xff]
    %v1007 = vld [vmem:[#allocation2 + $0x3b0] sm:$0xff]
    %v1008 = vld [vmem:[#allocation2 + $0x3b8] sm:$0xff]
    %v1009 = vld [vmem:[#allocation2 + $0x3c0] sm:$0xff]
    %v1010 = vld [vmem:[#allocation2 + $0x3c8] sm:$0xff]
    %v1011 = vld [vmem:[#allocation2 + $0x3d0] sm:$0xff]
    %v1012 = vld [vmem:[#allocation2 + $0x3d8] sm:$0xf]
    %v1014 = vsel %vm741, %v992, 0
    %v1017 = vsel %vm741, %v995, 0
    %v1020 = vsel %vm741, %v998, 0
    %v1023 = vsel %vm57, %v1012, 0
    %1025 = vmatpush.msra.mxu0 0.0
    %1026 = vmatpush.msra.mxu0 0.0
    %1027 = vmatpush.msra.mxu0 0.0
    %1028 = vmatpush.msra.mxu0 %v1023
    %1029 = vmatpush.msra.mxu0 %v1011
    %1030 = vmatpush.msra.mxu0 %v1010
    %1031 = vmatpush.msra.mxu0 %v1009
    %1032 = vmatpush.msra.mxu0 %v1008
    %1033 = vmatpush.msra.mxu0 %v1007
    %1034 = vmatpush.msra.mxu0 %v1006
    %1035 = vmatpush.msra.mxu0 %v1005
    %1036 = vmatpush.msra.mxu0 %v1004
    %1037 = vmatpush.msra.mxu0 %v1003
    %1038 = vmatpush.msra.mxu0 %v1002
    %1039 = vmatpush.msra.mxu0 %v1001
    %1040 = vmatpush.msra.mxu0 %v1000
    %1041 = vmatmul.f32.gmra.mxu0 %v1014
    %v1042 = vpop.f32.mrf.mxu0
    %v1043 = vadd.f32 0.0, %v1042
    %1044 = vmatmul.f32.gmra.mxu0 %v1017
    %v1045 = vpop.f32.mrf.mxu0
    %v1046 = vadd.f32 0.0, %v1045
    %1047 = vmatmul.f32.gmra.mxu0 %v1020
    %v1048 = vpop.f32.mrf.mxu0
    %v1049 = vadd.f32 0.0, %v1048
    %1050 = vdwg.mxu0
    %v1052 = vsel %vm741, %v946, 0
    %v1055 = vsel %vm741, %v947, 0
    %v1057 = vsel %vm741, %v948, 0
    %v1060 = vsel %vm57, %v961, 0
    %1062 = vmatpush.msra.mxu0 0.0
    %1063 = vmatpush.msra.mxu0 0.0
    %1064 = vmatpush.msra.mxu0 0.0
    %1065 = vmatpush.msra.mxu0 %v1060
    %1066 = vmatpush.msra.mxu0 %v960
    %1067 = vmatpush.msra.mxu0 %v959
    %1068 = vmatpush.msra.mxu0 %v958
    %1069 = vmatpush.msra.mxu0 %v957
    %1070 = vmatpush.msra.mxu0 %v956
    %1071 = vmatpush.msra.mxu0 %v955
    %1072 = vmatpush.msra.mxu0 %v954
    %1073 = vmatpush.msra.mxu0 %v953
    %1074 = vmatpush.msra.mxu0 %v952
    %1075 = vmatpush.msra.mxu0 %v951
    %1076 = vmatpush.msra.mxu0 %v950
    %1077 = vmatpush.msra.mxu0 %v949
    %1078 = vmatmul.f32.gmra.mxu0 %v1052
    %v1079 = vpop.f32.mrf.mxu0
    %v1080 = vadd.f32 %v1043, %v1079
    %1081 = vmatmul.f32.gmra.mxu0 %v1055
    %v1082 = vpop.f32.mrf.mxu0
    %v1083 = vadd.f32 %v1046, %v1082
    %1084 = vmatmul.f32.gmra.mxu0 %v1057
    %v1085 = vpop.f32.mrf.mxu0
    %v1086 = vadd.f32 %v1049, %v1085
    %1087 = vdwg.mxu0
    %1088 = vmatpush.msra.mxu0 0.0
    %1089 = vmatpush.msra.mxu0 0.0
    %1090 = vmatpush.msra.mxu0 0.0
    %1091 = vmatpush.msra.mxu0 0.0
    %1092 = vmatpush.msra.mxu0 0.0
    %1093 = vmatpush.msra.mxu0 0.0
    %1094 = vmatpush.msra.mxu0 0.0
    %1095 = vmatpush.msra.mxu0 0.0
    %1096 = vmatpush.msra.mxu0 0.0
    %1097 = vmatpush.msra.mxu0 0.0
    %1098 = vmatpush.msra.mxu0 0.0
    %1099 = vmatpush.msra.mxu0 0.0
    %1100 = vmatpush.msra.mxu0 0.0
    %1101 = vmatpush.msra.mxu0 %v972
    %1102 = vmatpush.msra.mxu0 %v947
    %1103 = vmatpush.msra.mxu0 %v946
    %1104 = vmatmul.f32.gmra.mxu0 %v485
    %v1105 = vpop.f32.mrf.mxu0
    %v1106 = vadd.f32 0.0, %v1105
    %1107 = vmatmul.f32.gmra.mxu0 %v488
    %v1108 = vpop.f32.mrf.mxu0
    %v1109 = vadd.f32 0.0, %v1108
    %1110 = vmatmul.f32.gmra.mxu0 %v491
    %v1111 = vpop.f32.mrf.mxu0
    %v1112 = vadd.f32 0.0, %v1111
    %1113 = vdwg.mxu0
    %v1114 = vld [vmem:[#allocation2 + $0x3e0] sm:$0xff]
    %v1115 = vld [vmem:[#allocation2 + $0x3e8] sm:$0xff]
    %v1116 = vld [vmem:[#allocation2 + $0x3f0] sm:$0xff]
    %v1117 = vld [vmem:[#allocation2 + $0x3f8] sm:$0xff]
    %v1118 = vld [vmem:[#allocation2 + $0x400] sm:$0xff]
    %v1119 = vld [vmem:[#allocation2 + $0x408] sm:$0xff]
    %v1120 = vld [vmem:[#allocation2 + $0x410] sm:$0xff]
    %v1121 = vld [vmem:[#allocation2 + $0x418] sm:$0xff]
    %v1122 = vld [vmem:[#allocation2 + $0x420] sm:$0xff]
    %v1123 = vld [vmem:[#allocation2 + $0x428] sm:$0xff]
    %v1124 = vld [vmem:[#allocation2 + $0x430] sm:$0xff]
    %v1125 = vld [vmem:[#allocation2 + $0x438] sm:$0xff]
    %v1126 = vld [vmem:[#allocation2 + $0x440] sm:$0xf]
    %v1128 = vsel %vm741, %v1106, 0
    %v1131 = vsel %vm741, %v1109, 0
    %v1134 = vsel %vm741, %v1112, 0
    %v1137 = vsel %vm57, %v1126, 0
    %1139 = vmatpush.msra.mxu0 0.0
    %1140 = vmatpush.msra.mxu0 0.0
    %1141 = vmatpush.msra.mxu0 0.0
    %1142 = vmatpush.msra.mxu0 %v1137
    %1143 = vmatpush.msra.mxu0 %v1125
    %1144 = vmatpush.msra.mxu0 %v1124
    %1145 = vmatpush.msra.mxu0 %v1123
    %1146 = vmatpush.msra.mxu0 %v1122
    %1147 = vmatpush.msra.mxu0 %v1121
    %1148 = vmatpush.msra.mxu0 %v1120
    %1149 = vmatpush.msra.mxu0 %v1119
    %1150 = vmatpush.msra.mxu0 %v1118
    %1151 = vmatpush.msra.mxu0 %v1117
    %1152 = vmatpush.msra.mxu0 %v1116
    %1153 = vmatpush.msra.mxu0 %v1115
    %1154 = vmatpush.msra.mxu0 %v1114
    %1155 = vmatmul.f32.gmra.mxu0 %v1128
    %v1156 = vpop.f32.mrf.mxu0
    %v1157 = vadd.f32 0.0, %v1156
    %1158 = vmatmul.f32.gmra.mxu0 %v1131
    %v1159 = vpop.f32.mrf.mxu0
    %v1160 = vadd.f32 0.0, %v1159
    %1161 = vmatmul.f32.gmra.mxu0 %v1134
    %v1162 = vpop.f32.mrf.mxu0
    %v1163 = vadd.f32 0.0, %v1162
    %1164 = vdwg.mxu0
    %v1165 = vadd.f32 %v1080, %v1157
    %v1166 = vadd.f32 %v1083, %v1160
    %v1167 = vadd.f32 %v1086, %v1163
    %v1168 = vld [vmem:[#allocation2 + $0x4b0] sm:$0x1]
    %v1169 = vperm.slane %v1168, 0
    %v1170 = vadd.f32 %v1165, %v1169
    %v1171 = vadd.f32 %v1166, %v1169
    %v1172 = vadd.f32 %v1167, %v1169
    %v1173 = vmax.f32 %v1170, 0.0
    %v1174 = vmax.f32 %v1171, 0.0
    %v1175 = vmax.f32 %v1172, 0.0
    %v1176 = vld [vmem:[#allocation2 + $0x4e8] sm:$0xff]
    %v1177 = vld [vmem:[#allocation2 + $0x4f0] sm:$0xff]
    %v1178 = vld [vmem:[#allocation2 + $0x4f8] sm:$0xf]
    %v1180 = vsel %vm57, %v1175, 0
    %1182 = vmatpush.msra.mxu0 0.0
    %1183 = vmatpush.msra.mxu0 0.0
    %1184 = vmatpush.msra.mxu0 0.0
    %1185 = vmatpush.msra.mxu0 0.0
    %1186 = vmatpush.msra.mxu0 0.0
    %1187 = vmatpush.msra.mxu0 0.0
    %1188 = vmatpush.msra.mxu0 0.0
    %1189 = vmatpush.msra.mxu0 0.0
    %1190 = vmatpush.msra.mxu0 0.0
    %1191 = vmatpush.msra.mxu0 0.0
    %1192 = vmatpush.msra.mxu0 0.0
    %1193 = vmatpush.msra.mxu0 0.0
    %1194 = vmatpush.msra.mxu0 0.0
    %1195 = vmatpush.msra.mxu0 %v1180
    %1196 = vmatpush.msra.mxu0 %v1174
    %1197 = vmatpush.msra.mxu0 %v1173
    %1198 = vmatmul.f32.gmra.mxu0 %v963
    %v1199 = vpop.f32.mrf.mxu0
    %v1200 = vadd.f32 0.0, %v1199
    %1201 = vmatmul.f32.gmra.mxu0 %v966
    %v1202 = vpop.f32.mrf.mxu0
    %v1203 = vadd.f32 0.0, %v1202
    %1204 = vmatmul.f32.gmra.mxu0 %v969
    %v1205 = vpop.f32.mrf.mxu0
    %v1206 = vadd.f32 0.0, %v1205
    %1207 = vdwg.mxu0
    %v1208 = vld [vmem:[#allocation2 + $0x4b8] sm:$0xff]
    %v1209 = vld [vmem:[#allocation2 + $0x4c0] sm:$0xff]
    %v1210 = vld [vmem:[#allocation2 + $0x4c8] sm:$0xf]
    %v1212 = vsel %vm47, %v1200, 0
    %v1215 = vsel %vm47, %v1203, 0
    %v1218 = vsel %vm47, %v1206, 0
    %v1221 = vsel %vm57, %v1210, 0
    %1223 = vmatpush.msra.mxu0 0.0
    %1224 = vmatpush.msra.mxu0 0.0
    %1225 = vmatpush.msra.mxu0 0.0
    %1226 = vmatpush.msra.mxu0 0.0
    %1227 = vmatpush.msra.mxu0 0.0
    %1228 = vmatpush.msra.mxu0 0.0
    %1229 = vmatpush.msra.mxu0 0.0
    %1230 = vmatpush.msra.mxu0 0.0
    %1231 = vmatpush.msra.mxu0 0.0
    %1232 = vmatpush.msra.mxu0 0.0
    %1233 = vmatpush.msra.mxu0 0.0
    %1234 = vmatpush.msra.mxu0 0.0
    %1235 = vmatpush.msra.mxu0 0.0
    %1236 = vmatpush.msra.mxu0 %v1221
    %1237 = vmatpush.msra.mxu0 %v1209
    %1238 = vmatpush.msra.mxu0 %v1208
    %1239 = vmatmul.f32.gmra.mxu0 %v1212
    %v1240 = vpop.f32.mrf.mxu0
    %v1241 = vadd.f32 0.0, %v1240
    %1242 = vmatmul.f32.gmra.mxu0 %v1215
    %v1243 = vpop.f32.mrf.mxu0
    %v1244 = vadd.f32 0.0, %v1243
    %1245 = vmatmul.f32.gmra.mxu0 %v1218
    %v1246 = vpop.f32.mrf.mxu0
    %v1247 = vadd.f32 0.0, %v1246
    %1248 = vdwg.mxu0
    %v1250 = vsel %vm47, %v1173, 0
    %v1253 = vsel %vm47, %v1174, 0
    %v1255 = vsel %vm47, %v1175, 0
    %v1258 = vsel %vm57, %v1178, 0
    %1260 = vmatpush.msra.mxu0 0.0
    %1261 = vmatpush.msra.mxu0 0.0
    %1262 = vmatpush.msra.mxu0 0.0
    %1263 = vmatpush.msra.mxu0 0.0
    %1264 = vmatpush.msra.mxu0 0.0
    %1265 = vmatpush.msra.mxu0 0.0
    %1266 = vmatpush.msra.mxu0 0.0
    %1267 = vmatpush.msra.mxu0 0.0
    %1268 = vmatpush.msra.mxu0 0.0
    %1269 = vmatpush.msra.mxu0 0.0
    %1270 = vmatpush.msra.mxu0 0.0
    %1271 = vmatpush.msra.mxu0 0.0
    %1272 = vmatpush.msra.mxu0 0.0
    %1273 = vmatpush.msra.mxu0 %v1258
    %1274 = vmatpush.msra.mxu0 %v1177
    %1275 = vmatpush.msra.mxu0 %v1176
    %1276 = vmatmul.f32.gmra.mxu0 %v1250
    %v1277 = vpop.f32.mrf.mxu0
    %v1278 = vadd.f32 %v1241, %v1277
    %1279 = vmatmul.f32.gmra.mxu0 %v1253
    %v1280 = vpop.f32.mrf.mxu0
    %v1281 = vadd.f32 %v1244, %v1280
    %1282 = vmatmul.f32.gmra.mxu0 %v1255
    %v1283 = vpop.f32.mrf.mxu0
    %v1284 = vadd.f32 %v1247, %v1283
    %1285 = vdwg.mxu0
    %1286 = vmatpush.msra.mxu0 0.0
    %1287 = vmatpush.msra.mxu0 0.0
    %1288 = vmatpush.msra.mxu0 0.0
    %1289 = vmatpush.msra.mxu0 0.0
    %1290 = vmatpush.msra.mxu0 0.0
    %1291 = vmatpush.msra.mxu0 0.0
    %1292 = vmatpush.msra.mxu0 0.0
    %1293 = vmatpush.msra.mxu0 0.0
    %1294 = vmatpush.msra.mxu0 0.0
    %1295 = vmatpush.msra.mxu0 0.0
    %1296 = vmatpush.msra.mxu0 0.0
    %1297 = vmatpush.msra.mxu0 0.0
    %1298 = vmatpush.msra.mxu0 0.0
    %1299 = vmatpush.msra.mxu0 %v1180
    %1300 = vmatpush.msra.mxu0 %v1174
    %1301 = vmatpush.msra.mxu0 %v1173
    %1302 = vmatmul.f32.gmra.mxu0 %v485
    %v1303 = vpop.f32.mrf.mxu0
    %v1304 = vadd.f32 0.0, %v1303
    %1305 = vmatmul.f32.gmra.mxu0 %v488
    %v1306 = vpop.f32.mrf.mxu0
    %v1307 = vadd.f32 0.0, %v1306
    %1308 = vmatmul.f32.gmra.mxu0 %v491
    %v1309 = vpop.f32.mrf.mxu0
    %v1310 = vadd.f32 0.0, %v1309
    %1311 = vdwg.mxu0
    %v1312 = vld [vmem:[#allocation2 + $0x4d0] sm:$0xff]
    %v1313 = vld [vmem:[#allocation2 + $0x4d8] sm:$0xff]
    %v1314 = vld [vmem:[#allocation2 + $0x4e0] sm:$0xf]
    %v1316 = vsel %vm47, %v1304, 0
    %v1319 = vsel %vm47, %v1307, 0
    %v1322 = vsel %vm47, %v1310, 0
    %v1325 = vsel %vm57, %v1314, 0
    %1327 = vmatpush.msra.mxu0 0.0
    %1328 = vmatpush.msra.mxu0 0.0
    %1329 = vmatpush.msra.mxu0 0.0
    %1330 = vmatpush.msra.mxu0 0.0
    %1331 = vmatpush.msra.mxu0 0.0
    %1332 = vmatpush.msra.mxu0 0.0
    %1333 = vmatpush.msra.mxu0 0.0
    %1334 = vmatpush.msra.mxu0 0.0
    %1335 = vmatpush.msra.mxu0 0.0
    %1336 = vmatpush.msra.mxu0 0.0
    %1337 = vmatpush.msra.mxu0 0.0
    %1338 = vmatpush.msra.mxu0 0.0
    %1339 = vmatpush.msra.mxu0 0.0
    %1340 = vmatpush.msra.mxu0 %v1325
    %1341 = vmatpush.msra.mxu0 %v1313
    %1342 = vmatpush.msra.mxu0 %v1312
    %1343 = vmatmul.f32.gmra.mxu0 %v1316
    %v1344 = vpop.f32.mrf.mxu0
    %v1345 = vadd.f32 0.0, %v1344
    %1346 = vmatmul.f32.gmra.mxu0 %v1319
    %v1347 = vpop.f32.mrf.mxu0
    %v1348 = vadd.f32 0.0, %v1347
    %1349 = vmatmul.f32.gmra.mxu0 %v1322
    %v1350 = vpop.f32.mrf.mxu0
    %v1351 = vadd.f32 0.0, %v1350
    %1352 = vdwg.mxu0
    %v1353 = vadd.f32 %v1278, %v1345
    %v1354 = vadd.f32 %v1281, %v1348
    %v1355 = vadd.f32 %v1284, %v1351
    %v1356 = vld [vmem:[#allocation2 + $0x500] sm:$0x1]
    %v1357 = vperm.slane %v1356, 0
    %v1358 = vadd.f32 %v1353, %v1357
    %v1359 = vadd.f32 %v1354, %v1357
    %v1360 = vadd.f32 %v1355, %v1357
    %v1361 = vmax.f32 %v1358, 0.0
    %v1362 = vmax.f32 %v1359, 0.0
    %v1363 = vmax.f32 %v1360, 0.0
    %v1364 = vld [vmem:[#allocation2 + $0x508] sm:$0xff]
    %v1365 = vld [vmem:[#allocation2 + $0x510] sm:$0xff]
    %v1366 = vld [vmem:[#allocation2 + $0x518] sm:$0xff]
    %v1367 = vld [vmem:[#allocation2 + $0x520] sm:$0xff]
    %v1368 = vld [vmem:[#allocation2 + $0x528] sm:$0xff]
    %v1369 = vld [vmem:[#allocation2 + $0x530] sm:$0xff]
    %v1370 = vld [vmem:[#allocation2 + $0x538] sm:$0xff]
    %v1371 = vld [vmem:[#allocation2 + $0x540] sm:$0xff]
    %v1372 = vld [vmem:[#allocation2 + $0x548] sm:$0xff]
    %v1373 = vld [vmem:[#allocation2 + $0x550] sm:$0xff]
    %v1374 = vld [vmem:[#allocation2 + $0x558] sm:$0xff]
    %v1375 = vld [vmem:[#allocation2 + $0x560] sm:$0xff]
    %v1376 = vld [vmem:[#allocation2 + $0x568] sm:$0xf]
    %v1377 = vld [vmem:[#allocation2 + $0x570] sm:$0x1]
    %v1378 = vperm.slane %v1377, 0
    %v1380 = vsel %vm57, %v1376, 0
    %1382 = vmatpush.msra.mxu0 0.0
    %1383 = vmatpush.msra.mxu0 0.0
    %1384 = vmatpush.msra.mxu0 0.0
    %1385 = vmatpush.msra.mxu0 %v1380
    %1386 = vmatpush.msra.mxu0 %v1375
    %1387 = vmatpush.msra.mxu0 %v1374
    %1388 = vmatpush.msra.mxu0 %v1373
    %1389 = vmatpush.msra.mxu0 %v1372
    %1390 = vmatpush.msra.mxu0 %v1371
    %1391 = vmatpush.msra.mxu0 %v1370
    %1392 = vmatpush.msra.mxu0 %v1369
    %1393 = vmatpush.msra.mxu0 %v1368
    %1394 = vmatpush.msra.mxu0 %v1367
    %1395 = vmatpush.msra.mxu0 %v1366
    %1396 = vmatpush.msra.mxu0 %v1365
    %1397 = vmatpush.msra.mxu0 %v1364
    %1398 = vmatmul.f32.gmra.mxu0 %v1052
    %v1399 = vpop.f32.mrf.mxu0
    %v1400 = vadd.f32 %v1378, %v1399
    %1401 = vmatmul.f32.gmra.mxu0 %v1055
    %v1402 = vpop.f32.mrf.mxu0
    %v1403 = vadd.f32 %v1378, %v1402
    %1404 = vmatmul.f32.gmra.mxu0 %v1057
    %v1405 = vpop.f32.mrf.mxu0
    %v1406 = vadd.f32 %v1378, %v1405
    %1407 = vdwg.mxu0
    %v1408 = vadd.f32 %v1361, %v1400
    %v1409 = vadd.f32 %v1362, %v1403
    %v1410 = vadd.f32 %v1363, %v1406
    %v1411 = vmax.f32 %v1408, 0.0
    %v1412 = vmax.f32 %v1409, 0.0
    %v1413 = vmax.f32 %v1410, 0.0
    %v1414 = vld [vmem:[#allocation2 + $0x60] sm:$0x3]
    %v1416 = vsel %vm47, %v1414, 0
    %v1419 = vsel %vm57, %v1413, 0
    %1421 = vmatpush.msra.mxu0 0.0
    %1422 = vmatpush.msra.mxu0 0.0
    %1423 = vmatpush.msra.mxu0 0.0
    %1424 = vmatpush.msra.mxu0 0.0
    %1425 = vmatpush.msra.mxu0 0.0
    %1426 = vmatpush.msra.mxu0 0.0
    %1427 = vmatpush.msra.mxu0 0.0
    %1428 = vmatpush.msra.mxu0 0.0
    %1429 = vmatpush.msra.mxu0 0.0
    %1430 = vmatpush.msra.mxu0 0.0
    %1431 = vmatpush.msra.mxu0 0.0
    %1432 = vmatpush.msra.mxu0 0.0
    %1433 = vmatpush.msra.mxu0 0.0
    %1434 = vmatpush.msra.mxu0 %v1419
    %1435 = vmatpush.msra.mxu0 %v1412
    %1436 = vmatpush.msra.mxu0 %v1411
    %1437 = vmatmul.f32.gmra.mxu0 %v1416
    %v1438 = vpop.f32.mrf.mxu0
    %v1439 = vadd.f32 0.0, %v1438
    %1440 = vdwg.mxu0
    %v1441 = vld [vmem:[#allocation2 + $0x578] sm:$0xff]
    %v1442 = vld [vmem:[#allocation2 + $0x580] sm:$0xff]
    %v1443 = vld [vmem:[#allocation2 + $0x588] sm:$0xf]
    %v1444 = vld [vmem:[%s1] sm:$0x3]
    %v1445 = vld [vmem:[#allocation2 + $0x590] sm:$0xff]
    %v1447 = vsel %vm88, %v1444, 0
    %1449 = vmatpush.msra.mxu0 0.0
    %1450 = vmatpush.msra.mxu0 0.0
    %1451 = vmatpush.msra.mxu0 0.0
    %1452 = vmatpush.msra.mxu0 0.0
    %1453 = vmatpush.msra.mxu0 0.0
    %1454 = vmatpush.msra.mxu0 0.0
    %1455 = vmatpush.msra.mxu0 0.0
    %1456 = vmatpush.msra.mxu0 0.0
    %1457 = vmatpush.msra.mxu0 0.0
    %1458 = vmatpush.msra.mxu0 0.0
    %1459 = vmatpush.msra.mxu0 0.0
    %1460 = vmatpush.msra.mxu0 0.0
    %1461 = vmatpush.msra.mxu0 0.0
    %1462 = vmatpush.msra.mxu0 0.0
    %1463 = vmatpush.msra.mxu0 0.0
    %1464 = vmatpush.msra.mxu0 %v1445
    %1465 = vmatmul.f32.gmra.mxu0 %v1447
    %v1466 = vpop.f32.mrf.mxu0
    %v1467 = vadd.f32 0.0, %v1466
    %1468 = vdwg.mxu0
    %v1470 = vsel %vm47, %v1439, 0
    %v1473 = vsel %vm57, %v1443, 0
    %1475 = vmatpush.msra.mxu0 0.0
    %1476 = vmatpush.msra.mxu0 0.0
    %1477 = vmatpush.msra.mxu0 0.0
    %1478 = vmatpush.msra.mxu0 0.0
    %1479 = vmatpush.msra.mxu0 0.0
    %1480 = vmatpush.msra.mxu0 0.0
    %1481 = vmatpush.msra.mxu0 0.0
    %1482 = vmatpush.msra.mxu0 0.0
    %1483 = vmatpush.msra.mxu0 0.0
    %1484 = vmatpush.msra.mxu0 0.0
    %1485 = vmatpush.msra.mxu0 0.0
    %1486 = vmatpush.msra.mxu0 0.0
    %1487 = vmatpush.msra.mxu0 0.0
    %1488 = vmatpush.msra.mxu0 %v1473
    %1489 = vmatpush.msra.mxu0 %v1442
    %1490 = vmatpush.msra.mxu0 %v1441
    %1491 = vmatmul.f32.gmra.mxu0 %v1470
    %v1492 = vpop.f32.mrf.mxu0
    %v1493 = vadd.f32 %v1467, %v1492
    %1494 = vdwg.mxu0
    %v1495 = vld [vmem:[#allocation2 + $0x598] sm:$0x1]
    %v1496 = vperm.slane %v1495, 0
    %v1497 = vadd.f32 %v1493, %v1496
    %v1498 = vmax.f32 %v1497, 0.0
    %v1499 = vld [vmem:[#allocation2 + $0x5a0] sm:$0xff]
    %v1500 = vld [vmem:[#allocation2 + $0x5a8] sm:$0xff]
    %v1501 = vld [vmem:[#allocation2 + $0x5b0] sm:$0xf]
    %v1502 = vld [vmem:[#allocation2 + $0x5b8] sm:$0x1]
    %v1503 = vperm.slane %v1502, 0
    %v1505 = vsel %vm47, %v1498, 0
    %v1508 = vsel %vm57, %v1501, 0
    %1510 = vmatpush.msra.mxu0 0.0
    %1511 = vmatpush.msra.mxu0 0.0
    %1512 = vmatpush.msra.mxu0 0.0
    %1513 = vmatpush.msra.mxu0 0.0
    %1514 = vmatpush.msra.mxu0 0.0
    %1515 = vmatpush.msra.mxu0 0.0
    %1516 = vmatpush.msra.mxu0 0.0
    %1517 = vmatpush.msra.mxu0 0.0
    %1518 = vmatpush.msra.mxu0 0.0
    %1519 = vmatpush.msra.mxu0 0.0
    %1520 = vmatpush.msra.mxu0 0.0
    %1521 = vmatpush.msra.mxu0 0.0
    %1522 = vmatpush.msra.mxu0 0.0
    %1523 = vmatpush.msra.mxu0 %v1508
    %1524 = vmatpush.msra.mxu0 %v1500
    %1525 = vmatpush.msra.mxu0 %v1499
    %1526 = vmatmul.f32.gmra.mxu0 %v1505
    %v1527 = vpop.f32.mrf.mxu0
    %v1528 = vadd.f32 %v1503, %v1527
    %1529 = vdwg.mxu0
    %v1530 = vmax.f32 %v1528, 0.0
    %v1531 = vld [vmem:[#allocation2 + $0x5c0] sm:$0xff]
    %v1532 = vld [vmem:[#allocation2 + $0x5c8] sm:$0xff]
    %v1533 = vld [vmem:[#allocation2 + $0x5d0] sm:$0xf]
    %v1534 = vld [vmem:[#allocation2 + $0x5d8] sm:$0x1]
    %v1535 = vperm.slane %v1534, 0
    %v1537 = vsel %vm47, %v1530, 0
    %v1540 = vsel %vm57, %v1533, 0
    %1542 = vmatpush.msra.mxu0 0.0
    %1543 = vmatpush.msra.mxu0 0.0
    %1544 = vmatpush.msra.mxu0 0.0
    %1545 = vmatpush.msra.mxu0 0.0
    %1546 = vmatpush.msra.mxu0 0.0
    %1547 = vmatpush.msra.mxu0 0.0
    %1548 = vmatpush.msra.mxu0 0.0
    %1549 = vmatpush.msra.mxu0 0.0
    %1550 = vmatpush.msra.mxu0 0.0
    %1551 = vmatpush.msra.mxu0 0.0
    %1552 = vmatpush.msra.mxu0 0.0
    %1553 = vmatpush.msra.mxu0 0.0
    %1554 = vmatpush.msra.mxu0 0.0
    %1555 = vmatpush.msra.mxu0 %v1540
    %1556 = vmatpush.msra.mxu0 %v1532
    %1557 = vmatpush.msra.mxu0 %v1531
    %1558 = vmatmul.f32.gmra.mxu0 %v1537
    %v1559 = vpop.f32.mrf.mxu0
    %v1560 = vadd.f32 %v1535, %v1559
    %1561 = vdwg.mxu0
    %1562 = vst [vmem:[#allocation5] sm:$0x3] %v1560
    // Predicated region
    $region18: #{ddqn_forward.1} parent=1 // pred_check
      _
    $region19: #{ddqn_forward.1} parent=1 // pred_check_branch
      %1564 = sbr.rel (0) target = $region21
    $region20: #{ddqn_forward.1} parent=1 // pred_region
      %1566 = vsyncadd [#allocation4], 0
      %s1568 = sshll.u32 [#allocation5], 4
      %s1569 = int_to_ptr.vmem [resolvable:$true] %s1568
      %s1570 = sshll.u32 %s3, 4
      %s1571 = int_to_ptr.hbm [resolvable:$true] %s1570
      %1573 = dma.vmem_to_hbm [thread:$0]  %s1569, 32, %s1571, [#allocation4]
    $region21: #{ddqn_forward.1} parent=1 // pred_fallthru
      _
    // Predicated region
    $region22: #{ddqn_forward.1} parent=1 // pred_check
      _
    $region23: #{ddqn_forward.1} parent=1 // pred_check_branch
      %1575 = sbr.rel (0) target = $region25
    $region24: #{ddqn_forward.1} parent=1 // pred_region
      %1577 = dma.done [#allocation4], 32
    $region25: #{ddqn_forward.1} parent=1 // pred_fallthru
      _
    %1578 = vsyncpa [#allocation3], 1
    %1579 = vsyncpa [#allocation4], 1

</llo_original>
